<compile_context>
chip_gen: v6e
topology: v6e:2x2x1
jax: 0.10.0
libtpu: 0.0.40
codegen_flags: <defaults>
</compile_context>

<pallas_src>
import numpy as np
import jax
import jax.numpy as jnp
from jax.experimental import pallas as pl
from jax.experimental.pallas import tpu as pltpu


# ------------------------------ Pallas kernels -------------------------------
def ppm_pool_conv_kernel(x_ref, at_ref, wt_ref, shift_ref, mask_ref, y_ref, z_acc):
    """Adaptive avg-pool (all bins) + 1x1 conv (BN folded) + ReLU + block mask."""
    c = pl.program_id(1)

    @pl.when(c == 0)
    def _init():
        z_acc[...] = jnp.zeros_like(z_acc)

    # pooledT (tile_c, P) = X_tile (tile_c, HW) @ A^T (HW, P); accumulate conv over C tiles.
    pooled_t = jnp.dot(x_ref[...].astype(at_ref.dtype), at_ref[...],
                       preferred_element_type=jnp.float32)
    z_acc[...] += jnp.dot(wt_ref[...], pooled_t.astype(wt_ref.dtype),
                          preferred_element_type=jnp.float32)

    @pl.when(c == pl.num_programs(1) - 1)
    def _finish():
        z = z_acc[...] + shift_ref[...]                     # (K, P) + (K, 1) broadcast
        # block-diagonal mask: bin-b pooled columns only feed bin-b output channels
        y_ref[...] = (jnp.maximum(z, 0.0) * mask_ref[...]).astype(y_ref.dtype)


def ppm_upsample_kernel(y_ref, ut_ref, out_ref):
    """Bilinear upsample (align_corners=True) of all bins; one (tile_k, HW) slab/step."""
    out_ref[...] = jnp.dot(y_ref[...], ut_ref[...],
                           preferred_element_type=jnp.float32).astype(out_ref.dtype)


# --------------------------- matrix construction -----------------------------
def _adaptive_pool_matrix(out_size, in_size):
    """Row i averages input indices [floor(i*in/out), ceil((i+1)*in/out))."""
    m = np.zeros((out_size, in_size), np.float32)
    for i in range(out_size):
        s = (i * in_size) // out_size
        e = -((-(i + 1) * in_size) // out_size)  # ceil((i+1)*in/out)
        m[i, s:e] = 1.0 / (e - s)
    return m


def _bilinear_matrix(out_size, in_size):
    """Bilinear (1-D) interpolation matrix with align_corners=True."""
    m = np.zeros((out_size, in_size), np.float32)
    if in_size == 1:
        m[:, 0] = 1.0
        return m
    scale = (in_size - 1) / (out_size - 1) if out_size > 1 else 0.0
    for o in range(out_size):
        src = o * scale
        i0 = min(int(np.floor(src)), in_size - 1)
        i1 = min(i0 + 1, in_size - 1)
        f = src - i0
        m[o, i0] += 1.0 - f
        m[o, i1] += f
    return m


# ------------------------ host-side constant preparation ---------------------
def prepare_ppm(params, bins, H, W, eps=1e-5, compute_dtype=jnp.bfloat16):
    """Build transposed pool/upsample matrices, fused conv+BN weights and the
    block-diagonal mask once (host-side, cacheable by the caller)."""
    HW = H * W
    nb = len(bins)
    R = params[0]["conv_w"].shape[1]
    K = nb * R
    P = sum(b * b for b in bins)
    # pad pooled-bin count to a full 128-lane tile; padded rows/cols stay zero
    P_pad = -(-P // 128) * 128

    A_all = np.zeros((P_pad, HW), np.float32)
    U_all = np.zeros((HW, P_pad), np.float32)
    maskT = np.zeros((K, P_pad), np.float32)
    W_rows, shift_rows = [], []
    row = 0
    for bi, (b, p) in enumerate(zip(bins, params)):
        A_all[row:row + b * b, :] = np.kron(_adaptive_pool_matrix(b, H),
                                            _adaptive_pool_matrix(b, W))
        U_all[:, row:row + b * b] = np.kron(_bilinear_matrix(H, b),
                                            _bilinear_matrix(W, b))
        maskT[bi * R:(bi + 1) * R, row:row + b * b] = 1.0
        inv_std = 1.0 / jnp.sqrt(p["var"] + eps)
        scale = p["gamma"] * inv_std
        W_rows.append((p["conv_w"] * scale[None, :]).T)     # (R, C): BN scale folded
        shift_rows.append(p["beta"] - p["mean"] * scale)    # eval-mode BN shift
        row += b * b

    return dict(
        R=R, K=K, P_pad=P_pad, H=H, W=W, HW=HW,
        AT=jnp.asarray(A_all.T, compute_dtype),                        # (HW, P_pad)
        UT=jnp.asarray(U_all.T, compute_dtype),                        # (P_pad, HW)
        WT=jnp.concatenate(W_rows, axis=0).astype(compute_dtype),      # (K, C)
        shiftT=jnp.concatenate(shift_rows).reshape(K, 1).astype(jnp.float32),
        maskT=jnp.asarray(maskT, jnp.float32),
        compute_dtype=compute_dtype,
    )


# ------------------------------ tiling helpers -------------------------------
def _pick_channel_tile(C, HW, K, x_itemsize, w_itemsize=2, max_block_bytes=6 << 20):
    # tile_c is the LAST dim of the W^T block -> must be a multiple of 128 or full C
    for t in (1024, 512, 256, 128):
        if C % t == 0 and t * HW * x_itemsize <= max_block_bytes \
                and K * t * w_itemsize <= max_block_bytes:
            return t
    return C  # full extent (always legal)


def _pick_out_tile(K, HW, itemsize=2, max_block_bytes=6 << 20):
    for t in (1024, 512, 256, 128, 64, 32, 16, 8):
        if K % t == 0 and t * HW * itemsize <= max_block_bytes:
            return t
    return K


def _padded_nbytes(shape, dtype):
    """VMEM footprint including lane/sublane padding of the last two dims."""
    shape = list(shape)
    shape[-1] = -(-shape[-1] // 128) * 128
    if len(shape) >= 2:
        shape[-2] = -(-shape[-2] // 8) * 8
    return int(np.prod(shape)) * np.dtype(dtype).itemsize


def _vmem_limit(est_bytes):
    try:
        phys = int(getattr(pltpu.get_tpu_info(), "vmem_capacity_bytes", 64 << 20))
    except Exception:
        phys = 64 << 20                     # conservative (v7x per-core VMEM)
    want = max(int(est_bytes * 1.5) + (1 << 20), 32 << 20)
    return max(min(want, int(phys * 0.85)), 8 << 20)


def _const_spec(block_shape, index_map, single_buffer):
    """BlockSpec for a constant-index operand; single-buffered when supported."""
    if single_buffer:
        try:
            return pl.BlockSpec(block_shape, index_map, pipeline_mode=pl.Buffered(1))
        except TypeError:
            pass
    return pl.BlockSpec(block_shape, index_map)


# ------------------------------- wrapper --------------------------------------
def _ppm_forward_impl(x_nchw, prep, single_buffer_consts):
    N, C, H, W = x_nchw.shape
    assert (H, W) == (prep["H"], prep["W"])
    HW = H * W
    K, P_pad = prep["K"], prep["P_pad"]
    cdt = prep["compute_dtype"]

    # channels-first view: NCHW is already (N, C, HW) contiguous -> free reshape
    x_cf = x_nchw.reshape(N, C, HW)
    x_isz = np.dtype(x_cf.dtype).itemsize

    tile_c = _pick_channel_tile(C, HW, K, x_isz)
    tile_k = _pick_out_tile(K, HW)
    cbuf = 1 if single_buffer_consts else 2

    # --- kernel 1: pooling + 1x1 conv + BN + ReLU + mask -> yT (N, K, P_pad) ---
    est1 = (2 * _padded_nbytes((tile_c, HW), x_cf.dtype)       # X block
            + cbuf * _padded_nbytes((HW, P_pad), cdt)          # A^T (resident)
            + 2 * _padded_nbytes((K, tile_c), cdt)             # W^T block
            + cbuf * _padded_nbytes((K, 1), jnp.float32)       # shift (resident)
            + cbuf * _padded_nbytes((K, P_pad), jnp.float32)   # mask (resident)
            + 2 * _padded_nbytes((K, P_pad), cdt)              # y output block
            + _padded_nbytes((K, P_pad), jnp.float32))         # z accumulator scratch

    y_t = pl.pallas_call(
        ppm_pool_conv_kernel,
        out_shape=jax.ShapeDtypeStruct((N, K, P_pad), cdt),
        grid_spec=pltpu.PrefetchScalarGridSpec(
            num_scalar_prefetch=0,
            grid=(N, C // tile_c),
            in_specs=[
                pl.BlockSpec((pl.Squeezed(), tile_c, HW), lambda n, c: (n, c, 0)),   # X
                _const_spec((HW, P_pad), lambda n, c: (0, 0), single_buffer_consts), # A^T
                pl.BlockSpec((K, tile_c), lambda n, c: (0, c)),                      # W^T
                _const_spec((K, 1), lambda n, c: (0, 0), single_buffer_consts),      # shift
                _const_spec((K, P_pad), lambda n, c: (0, 0), single_buffer_consts),  # mask
            ],
            out_specs=pl.BlockSpec((pl.Squeezed(), K, P_pad), lambda n, c: (n, 0, 0)),
            scratch_shapes=[pltpu.VMEM((K, P_pad), jnp.float32)],
        ),
        compiler_params=pltpu.CompilerParams(
            dimension_semantics=("parallel", "arbitrary"),
            vmem_limit_bytes=_vmem_limit(est1),
        ),
    )(x_cf, prep["AT"], prep["WT"], prep["shiftT"], prep["maskT"])

    # --- kernel 2: bilinear upsample, tiled over output channels, bf16 output ---
    est2 = (2 * _padded_nbytes((tile_k, P_pad), cdt)
            + cbuf * _padded_nbytes((P_pad, HW), cdt)
            + 2 * _padded_nbytes((tile_k, HW), cdt))

    out_t = pl.pallas_call(
        ppm_upsample_kernel,
        out_shape=jax.ShapeDtypeStruct((N, K, HW), cdt),
        grid_spec=pltpu.PrefetchScalarGridSpec(
            num_scalar_prefetch=0,
            grid=(N, K // tile_k),
            in_specs=[
                pl.BlockSpec((pl.Squeezed(), tile_k, P_pad), lambda n, k: (n, k, 0)),  # yT
                _const_spec((P_pad, HW), lambda n, k: (0, 0), single_buffer_consts),   # U^T
            ],
            out_specs=pl.BlockSpec((pl.Squeezed(), tile_k, HW), lambda n, k: (n, k, 0)),
        ),
        compiler_params=pltpu.CompilerParams(
            dimension_semantics=("parallel", "parallel"),
            vmem_limit_bytes=_vmem_limit(est2),
        ),
    )(y_t, prep["UT"])

    branch = out_t.reshape(N, K, H, W)          # free reshape, no transpose
    return jnp.concatenate([x_nchw, branch.astype(x_nchw.dtype)], axis=1)


def ppm_forward(x_nchw, prep, single_buffer_consts=True):
    if not single_buffer_consts:
        return _ppm_forward_impl(x_nchw, prep, False)
    try:
        return _ppm_forward_impl(x_nchw, prep, True)
    except Exception:
        # pl.Buffered(1) (single-buffering of constant operands) not supported in
        # this jax version -> fall back to default double buffering.
        return _ppm_forward_impl(x_nchw, prep, False)


# --------------------------- pure-JAX reference ------------------------------
def ppm_reference(x_nchw, params, bins, eps=1e-5):
    N, C, H, W = x_nchw.shape
    x_flat = jnp.transpose(x_nchw, (0, 2, 3, 1)).reshape(N, H * W, C)
    outs = [x_nchw]
    for b, p in zip(bins, params):
        A = jnp.asarray(np.kron(_adaptive_pool_matrix(b, H), _adaptive_pool_matrix(b, W)))
        U = jnp.asarray(np.kron(_bilinear_matrix(H, b), _bilinear_matrix(W, b)))
        pooled = jnp.einsum('ph,nhc->npc', A, x_flat)
        z = jnp.einsum('npc,cr->npr', pooled, p["conv_w"])
        scale = p["gamma"] / jnp.sqrt(p["var"] + eps)
        shift = p["beta"] - p["mean"] * scale
        y = jnp.maximum(z * scale + shift, 0.0)
        up = jnp.einsum('hp,npr->nhr', U, y)
        outs.append(jnp.transpose(up.reshape(N, H, W, -1), (0, 3, 1, 2)))
    return jnp.concatenate(outs, axis=1)


# ------------------------------ param init -----------------------------------
def init_params(key, in_dim, reduction_dim, bins):
    params = []
    for _ in bins:
        k1, k2, k3, k4, k5, key = jax.random.split(key, 6)
        params.append(dict(
            # torch Conv2d weight (R, C, 1, 1) -> stored as (C, R) channel matmul
            conv_w=0.1 * jax.random.normal(k1, (in_dim, reduction_dim), jnp.float32),
            gamma=1.0 + 0.1 * jax.random.normal(k2, (reduction_dim,), jnp.float32),
            beta=0.1 * jax.random.normal(k3, (reduction_dim,), jnp.float32),
            mean=0.1 * jax.random.normal(k4, (reduction_dim,), jnp.float32),
            var=jnp.abs(jax.random.normal(k5, (reduction_dim,), jnp.float32)) + 0.5,
        ))
    return params


if __name__ == "__main__":
    key = jax.random.PRNGKey(0)
    kx, kp = jax.random.split(key)

    N, C, H, W = 2, 8, 16, 16
    bins = (1, 2, 3, 6)
    reduction_dim = C // len(bins)  # = 2

    x = jax.random.normal(kx, (N, C, H, W), jnp.float32)
    params = init_params(kp, C, reduction_dim, bins)

    prep = prepare_ppm(params, bins, H, W)          # host-side, cache across calls
    out = jax.block_until_ready(ppm_forward(x, prep))

    ref = jax.block_until_ready(ppm_reference(x, params, bins))
    assert out.shape == (N, C + reduction_dim * len(bins), H, W), out.shape
    # bf16 weight streaming / bf16 branch output with f32 accumulation -> small drift
    assert np.allclose(np.asarray(out), np.asarray(ref), atol=2e-2, rtol=2e-2)

    print("KERNEL_OK")
</pallas_src>

<mosaic_0001>
module attributes {stable_mosaic.version = 11 : i64} {
  func.func @ppm_pool_conv_kernel(%arg0: i32, %arg1: i32, %arg2: memref<1x8x256xf32, #tpu.memory_space<vmem>>, %arg3: memref<256x128xbf16, #tpu.memory_space<vmem>>, %arg4: memref<8x8xbf16, #tpu.memory_space<vmem>>, %arg5: memref<8x1xf32, #tpu.memory_space<vmem>>, %arg6: memref<8x128xf32, #tpu.memory_space<vmem>>, %arg7: memref<1x8x128xbf16, #tpu.memory_space<vmem>>, %arg8: memref<8x128xf32, #tpu.memory_space<vmem>>) attributes {dimension_semantics = [#tpu.dimension_semantics<parallel>, #tpu.dimension_semantics<arbitrary>], iteration_bounds = array<i64: 2, 1>, scalar_prefetch = 0 : i64, scratch_operands = 1 : i64, tpu.core_type = #tpu.core_type<tc>, window_params = [{transform_indices = @transform_0, window_bounds = array<i64: 1, 8, 256>}, {pipeline_mode = #tpu.pipeline_mode<synchronous>, transform_indices = @transform_1, window_bounds = array<i64: 256, 128>}, {transform_indices = @transform_2, window_bounds = array<i64: 8, 8>}, {pipeline_mode = #tpu.pipeline_mode<synchronous>, transform_indices = @transform_3, window_bounds = array<i64: 8, 1>}, {pipeline_mode = #tpu.pipeline_mode<synchronous>, transform_indices = @transform_4, window_bounds = array<i64: 8, 128>}, {transform_indices = @transform_5, window_bounds = array<i64: 1, 8, 128>}]} {
    %c0_i32 = arith.constant 0 : i32
    %0 = arith.cmpi eq, %arg1, %c0_i32 : i32
    %1 = arith.extui %0 : i1 to i32
    %c0_i32_0 = arith.constant 0 : i32
    %2 = arith.cmpi ne, %1, %c0_i32_0 : i32
    scf.if %2 {
      %cst_14 = arith.constant 0.000000e+00 : f32
      %17 = vector.broadcast %cst_14 : f32 to vector<8x128xf32>
      %c0_15 = arith.constant 0 : index
      %c0_16 = arith.constant 0 : index
      %18 = vector.load %arg8[%c0_15, %c0_16] : memref<8x128xf32, #tpu.memory_space<vmem>>, vector<8x128xf32>
      tpu.vector_store %arg8[%c0_15, %c0_16], %17 {strides = array<i32>} : memref<8x128xf32, #tpu.memory_space<vmem>>, vector<8x128xf32>,
    } else {
    }
    %c0 = arith.constant 0 : index
    %c0_1 = arith.constant 0 : index
    %c0_2 = arith.constant 0 : index
    %3 = vector.load %arg2[%c0, %c0_1, %c0_2] : memref<1x8x256xf32, #tpu.memory_space<vmem>>, vector<1x8x256xf32>
    %4 = vector.shape_cast %3 : vector<1x8x256xf32> to vector<8x256xf32>
    %5 = arith.truncf %4 : vector<8x256xf32> to vector<8x256xbf16>
    %c0_3 = arith.constant 0 : index
    %c0_4 = arith.constant 0 : index
    %6 = vector.load %arg3[%c0_3, %c0_4] : memref<256x128xbf16, #tpu.memory_space<vmem>>, vector<256x128xbf16>
    %cst = arith.constant dense<0.000000e+00> : vector<8x128xf32>
    %7 = tpu.matmul %5, %6, %cst {dimension_numbers = #tpu.dot_dimension_numbers<[1], [0], [0], [1], [0, 0, 1, 1], [], []>} : vector<8x256xbf16>, vector<256x128xbf16>, vector<8x128xf32> -> vector<8x128xf32>
    %c0_5 = arith.constant 0 : index
    %c0_6 = arith.constant 0 : index
    %8 = vector.load %arg8[%c0_5, %c0_6] : memref<8x128xf32, #tpu.memory_space<vmem>>, vector<8x128xf32>
    %c0_7 = arith.constant 0 : index
    %c0_8 = arith.constant 0 : index
    %9 = vector.load %arg4[%c0_7, %c0_8] : memref<8x8xbf16, #tpu.memory_space<vmem>>, vector<8x8xbf16>
    %10 = arith.truncf %7 : vector<8x128xf32> to vector<8x128xbf16>
    %cst_9 = arith.constant dense<0.000000e+00> : vector<8x128xf32>
    %11 = tpu.matmul %9, %10, %cst_9 {dimension_numbers = #tpu.dot_dimension_numbers<[1], [0], [0], [1], [0, 0, 1, 1], [], []>} : vector<8x8xbf16>, vector<8x128xbf16>, vector<8x128xf32> -> vector<8x128xf32>
    %12 = arith.addf %8, %11 : vector<8x128xf32>
    %c0_10 = arith.constant 0 : index
    %c0_11 = arith.constant 0 : index
    %13 = vector.load %arg8[%c0_10, %c0_11] : memref<8x128xf32, #tpu.memory_space<vmem>>, vector<8x128xf32>
    tpu.vector_store %arg8[%c0_10, %c0_11], %12 {strides = array<i32>} : memref<8x128xf32, #tpu.memory_space<vmem>>, vector<8x128xf32>,
    %c0_i32_12 = arith.constant 0 : i32
    %14 = arith.cmpi eq, %arg1, %c0_i32_12 : i32
    %15 = arith.extui %14 : i1 to i32
    %c0_i32_13 = arith.constant 0 : i32
    %16 = arith.cmpi ne, %15, %c0_i32_13 : i32
    scf.if %16 {
      %c0_14 = arith.constant 0 : index
      %c0_15 = arith.constant 0 : index
      %17 = vector.load %arg8[%c0_14, %c0_15] : memref<8x128xf32, #tpu.memory_space<vmem>>, vector<8x128xf32>
      %c0_16 = arith.constant 0 : index
      %c0_17 = arith.constant 0 : index
      %18 = vector.load %arg5[%c0_16, %c0_17] : memref<8x1xf32, #tpu.memory_space<vmem>>, vector<8x1xf32>
      %19 = vector.broadcast %18 : vector<8x1xf32> to vector<8x128xf32>
      %20 = arith.addf %17, %19 : vector<8x128xf32>
      %cst_18 = arith.constant 0.000000e+00 : f32
      %21 = vector.broadcast %cst_18 : f32 to vector<8x128xf32>
      %22 = arith.maximumf %20, %21 : vector<8x128xf32>
      %c0_19 = arith.constant 0 : index
      %c0_20 = arith.constant 0 : index
      %23 = vector.load %arg6[%c0_19, %c0_20] : memref<8x128xf32, #tpu.memory_space<vmem>>, vector<8x128xf32>
      %24 = arith.mulf %22, %23 : vector<8x128xf32>
      %25 = arith.truncf %24 : vector<8x128xf32> to vector<8x128xbf16>
      %c0_21 = arith.constant 0 : index
      %c0_22 = arith.constant 0 : index
      %c0_23 = arith.constant 0 : index
      %26 = vector.load %arg7[%c0_21, %c0_22, %c0_23] : memref<1x8x128xbf16, #tpu.memory_space<vmem>>, vector<1x8x128xbf16>
      %27 = vector.shape_cast %26 : vector<1x8x128xbf16> to vector<8x128xbf16>
      %28 = vector.shape_cast %25 : vector<8x128xbf16> to vector<1x8x128xbf16>
      tpu.vector_store %arg7[%c0_21, %c0_22, %c0_23], %28 {strides = array<i32>} : memref<1x8x128xbf16, #tpu.memory_space<vmem>>, vector<1x8x128xbf16>,
    } else {
    }
    return
  }
  func.func @transform_0(%arg0: i32, %arg1: i32) -> (i32, i32, i32) {
    %c0_i32 = arith.constant 0 : i32
    %c0_i32_0 = arith.constant 0 : i32
    return %arg0, %arg1, %c0_i32 : i32, i32, i32
  }
  func.func @transform_1(%arg0: i32, %arg1: i32) -> (i32, i32) {
    %c0_i32 = arith.constant 0 : i32
    %c0_i32_0 = arith.constant 0 : i32
    %c0_i32_1 = arith.constant 0 : i32
    return %c0_i32, %c0_i32_0 : i32, i32
  }
  func.func @transform_2(%arg0: i32, %arg1: i32) -> (i32, i32) {
    %c0_i32 = arith.constant 0 : i32
    %c0_i32_0 = arith.constant 0 : i32
    return %c0_i32, %arg1 : i32, i32
  }
  func.func @transform_3(%arg0: i32, %arg1: i32) -> (i32, i32) {
    %c0_i32 = arith.constant 0 : i32
    %c0_i32_0 = arith.constant 0 : i32
    %c0_i32_1 = arith.constant 0 : i32
    return %c0_i32, %c0_i32_0 : i32, i32
  }
  func.func @transform_4(%arg0: i32, %arg1: i32) -> (i32, i32) {
    %c0_i32 = arith.constant 0 : i32
    %c0_i32_0 = arith.constant 0 : i32
    %c0_i32_1 = arith.constant 0 : i32
    return %c0_i32, %c0_i32_0 : i32, i32
  }
  func.func @transform_5(%arg0: i32, %arg1: i32) -> (i32, i32, i32) {
    %c0_i32 = arith.constant 0 : i32
    %c0_i32_0 = arith.constant 0 : i32
    %c0_i32_1 = arith.constant 0 : i32
    return %arg0, %c0_i32, %c0_i32_0 : i32, i32, i32
  }
}

module attributes {stable_mosaic.version = 11 : i64} {
  func.func @ppm_pool_conv_kernel(%arg0: i32, %arg1: i32, %arg2: memref<1x8x256xf32, #tpu.memory_space<vmem>>, %arg3: memref<256x128xbf16, #tpu.memory_space<vmem>>, %arg4: memref<8x8xbf16, #tpu.memory_space<vmem>>, %arg5: memref<8x1xf32, #tpu.memory_space<vmem>>, %arg6: memref<8x128xf32, #tpu.memory_space<vmem>>, %arg7: memref<1x8x128xbf16, #tpu.memory_space<vmem>>, %arg8: memref<8x128xf32, #tpu.memory_space<vmem>>) attributes {dimension_semantics = [#tpu.dimension_semantics<parallel>, #tpu.dimension_semantics<arbitrary>], iteration_bounds = array<i64: 2, 1>, scalar_prefetch = 0 : i64, scratch_operands = 1 : i64, tpu.core_type = #tpu.core_type<tc>, window_params = [{transform_indices = @transform_0, window_bounds = array<i64: 1, 8, 256>}, {pipeline_mode = #tpu.pipeline_mode<synchronous>, transform_indices = @transform_1, window_bounds = array<i64: 256, 128>}, {transform_indices = @transform_2, window_bounds = array<i64: 8, 8>}, {pipeline_mode = #tpu.pipeline_mode<synchronous>, transform_indices = @transform_3, window_bounds = array<i64: 8, 1>}, {pipeline_mode = #tpu.pipeline_mode<synchronous>, transform_indices = @transform_4, window_bounds = array<i64: 8, 128>}, {transform_indices = @transform_5, window_bounds = array<i64: 1, 8, 128>}]} {
    %c0_i32 = arith.constant 0 : i32
    %0 = arith.cmpi eq, %arg1, %c0_i32 : i32
    %1 = arith.extui %0 : i1 to i32
    %c0_i32_0 = arith.constant 0 : i32
    %2 = arith.cmpi ne, %1, %c0_i32_0 : i32
    scf.if %2 {
      %cst_14 = arith.constant 0.000000e+00 : f32
      %17 = vector.broadcast %cst_14 : f32 to vector<8x128xf32>
      %c0_15 = arith.constant 0 : index
      %c0_16 = arith.constant 0 : index
      %18 = vector.load %arg8[%c0_15, %c0_16] : memref<8x128xf32, #tpu.memory_space<vmem>>, vector<8x128xf32>
      tpu.vector_store %arg8[%c0_15, %c0_16], %17 {strides = array<i32>} : memref<8x128xf32, #tpu.memory_space<vmem>>, vector<8x128xf32>,
    } else {
    }
    %c0 = arith.constant 0 : index
    %c0_1 = arith.constant 0 : index
    %c0_2 = arith.constant 0 : index
    %3 = vector.load %arg2[%c0, %c0_1, %c0_2] : memref<1x8x256xf32, #tpu.memory_space<vmem>>, vector<1x8x256xf32>
    %4 = vector.shape_cast %3 : vector<1x8x256xf32> to vector<8x256xf32>
    %5 = arith.truncf %4 : vector<8x256xf32> to vector<8x256xbf16>
    %c0_3 = arith.constant 0 : index
    %c0_4 = arith.constant 0 : index
    %6 = vector.load %arg3[%c0_3, %c0_4] : memref<256x128xbf16, #tpu.memory_space<vmem>>, vector<256x128xbf16>
    %cst = arith.constant dense<0.000000e+00> : vector<8x128xf32>
    %7 = tpu.matmul %5, %6, %cst {dimension_numbers = #tpu.dot_dimension_numbers<[1], [0], [0], [1], [0, 0, 1, 1], [], []>} : vector<8x256xbf16>, vector<256x128xbf16>, vector<8x128xf32> -> vector<8x128xf32>
    %c0_5 = arith.constant 0 : index
    %c0_6 = arith.constant 0 : index
    %8 = vector.load %arg8[%c0_5, %c0_6] : memref<8x128xf32, #tpu.memory_space<vmem>>, vector<8x128xf32>
    %c0_7 = arith.constant 0 : index
    %c0_8 = arith.constant 0 : index
    %9 = vector.load %arg4[%c0_7, %c0_8] : memref<8x8xbf16, #tpu.memory_space<vmem>>, vector<8x8xbf16>
    %10 = arith.truncf %7 : vector<8x128xf32> to vector<8x128xbf16>
    %cst_9 = arith.constant dense<0.000000e+00> : vector<8x128xf32>
    %11 = tpu.matmul %9, %10, %cst_9 {dimension_numbers = #tpu.dot_dimension_numbers<[1], [0], [0], [1], [0, 0, 1, 1], [], []>} : vector<8x8xbf16>, vector<8x128xbf16>, vector<8x128xf32> -> vector<8x128xf32>
    %12 = arith.addf %8, %11 : vector<8x128xf32>
    %c0_10 = arith.constant 0 : index
    %c0_11 = arith.constant 0 : index
    %13 = vector.load %arg8[%c0_10, %c0_11] : memref<8x128xf32, #tpu.memory_space<vmem>>, vector<8x128xf32>
    tpu.vector_store %arg8[%c0_10, %c0_11], %12 {strides = array<i32>} : memref<8x128xf32, #tpu.memory_space<vmem>>, vector<8x128xf32>,
    %c0_i32_12 = arith.constant 0 : i32
    %14 = arith.cmpi eq, %arg1, %c0_i32_12 : i32
    %15 = arith.extui %14 : i1 to i32
    %c0_i32_13 = arith.constant 0 : i32
    %16 = arith.cmpi ne, %15, %c0_i32_13 : i32
    scf.if %16 {
      %c0_14 = arith.constant 0 : index
      %c0_15 = arith.constant 0 : index
      %17 = vector.load %arg8[%c0_14, %c0_15] : memref<8x128xf32, #tpu.memory_space<vmem>>, vector<8x128xf32>
      %c0_16 = arith.constant 0 : index
      %c0_17 = arith.constant 0 : index
      %18 = vector.load %arg5[%c0_16, %c0_17] : memref<8x1xf32, #tpu.memory_space<vmem>>, vector<8x1xf32>
      %19 = vector.broadcast %18 : vector<8x1xf32> to vector<8x128xf32>
      %20 = arith.addf %17, %19 : vector<8x128xf32>
      %cst_18 = arith.constant 0.000000e+00 : f32
      %21 = vector.broadcast %cst_18 : f32 to vector<8x128xf32>
      %22 = arith.maximumf %20, %21 : vector<8x128xf32>
      %c0_19 = arith.constant 0 : index
      %c0_20 = arith.constant 0 : index
      %23 = vector.load %arg6[%c0_19, %c0_20] : memref<8x128xf32, #tpu.memory_space<vmem>>, vector<8x128xf32>
      %24 = arith.mulf %22, %23 : vector<8x128xf32>
      %25 = arith.truncf %24 : vector<8x128xf32> to vector<8x128xbf16>
      %c0_21 = arith.constant 0 : index
      %c0_22 = arith.constant 0 : index
      %c0_23 = arith.constant 0 : index
      %26 = vector.load %arg7[%c0_21, %c0_22, %c0_23] : memref<1x8x128xbf16, #tpu.memory_space<vmem>>, vector<1x8x128xbf16>
      %27 = vector.shape_cast %26 : vector<1x8x128xbf16> to vector<8x128xbf16>
      %28 = vector.shape_cast %25 : vector<8x128xbf16> to vector<1x8x128xbf16>
      tpu.vector_store %arg7[%c0_21, %c0_22, %c0_23], %28 {strides = array<i32>} : memref<1x8x128xbf16, #tpu.memory_space<vmem>>, vector<1x8x128xbf16>,
    } else {
    }
    return
  }
  func.func @transform_0(%arg0: i32, %arg1: i32) -> (i32, i32, i32) {
    %c0_i32 = arith.constant 0 : i32
    %c0_i32_0 = arith.constant 0 : i32
    return %arg0, %arg1, %c0_i32 : i32, i32, i32
  }
  func.func @transform_1(%arg0: i32, %arg1: i32) -> (i32, i32) {
    %c0_i32 = arith.constant 0 : i32
    %c0_i32_0 = arith.constant 0 : i32
    %c0_i32_1 = arith.constant 0 : i32
    return %c0_i32, %c0_i32_0 : i32, i32
  }
  func.func @transform_2(%arg0: i32, %arg1: i32) -> (i32, i32) {
    %c0_i32 = arith.constant 0 : i32
    %c0_i32_0 = arith.constant 0 : i32
    return %c0_i32, %arg1 : i32, i32
  }
  func.func @transform_3(%arg0: i32, %arg1: i32) -> (i32, i32) {
    %c0_i32 = arith.constant 0 : i32
    %c0_i32_0 = arith.constant 0 : i32
    %c0_i32_1 = arith.constant 0 : i32
    return %c0_i32, %c0_i32_0 : i32, i32
  }
  func.func @transform_4(%arg0: i32, %arg1: i32) -> (i32, i32) {
    %c0_i32 = arith.constant 0 : i32
    %c0_i32_0 = arith.constant 0 : i32
    %c0_i32_1 = arith.constant 0 : i32
    return %c0_i32, %c0_i32_0 : i32, i32
  }
  func.func @transform_5(%arg0: i32, %arg1: i32) -> (i32, i32, i32) {
    %c0_i32 = arith.constant 0 : i32
    %c0_i32_0 = arith.constant 0 : i32
    %c0_i32_1 = arith.constant 0 : i32
    return %arg0, %c0_i32, %c0_i32_0 : i32, i32, i32
  }
}

</mosaic_0001>

<llo_original>
// kernel: tpu_custom_call.1
$region0: #{tpu_custom_call.1}
  #allocation0 [shape = 'u32[]', space=smem, size = 0x4, offset = 0x4, fixed_abs, tag = 'smem constant byte address 0x4 - core index']
  #allocation1 [shape = 'u32[144,128]{1,0:T(1,128)}', space=vmem, size = 0x12000, scoped, tag = 'internal scratch']
  #allocation2 [shape = 'f32[8,128]{1,0:T(8,128)}', space=vmem, size = 0x1000, scoped, tag = 'scratch operand']
  %s0 = inlined_call_operand.hbm [shape: f32[2,8,256], index: 0, kind: input, shape index: {}]
  %s1 = inlined_call_operand.hbm [shape: bf16[256,128], index: 1, kind: input, shape index: {}]
  %s2 = inlined_call_operand.vmem [shape: bf16[8,8], index: 2, kind: input, shape index: {}]
  %s3 = inlined_call_operand.vmem [shape: f32[8,1], index: 3, kind: input, shape index: {}]
  %s4 = inlined_call_operand.vmem [shape: f32[8,128], index: 4, kind: input, shape index: {}]
  %s5 = inlined_call_operand.hbm [shape: bf16[2,8,128], index: 5, kind: output, shape index: {}]
  %s6 = sld [smem:[#allocation0]]
  $region69: #{tpu_custom_call.1} parent=0
    _
  %s8 = ssub.s32 1, %s6
  %s9 = scalar_select 0, %s8, %s6
  $region1: #{tpu_custom_call.1} parent=0
    #allocation3 [shape = 'u8[16384]{0}', space=vmem, size = 0x4000, scoped, tag = 'input window, operand 0']
    #allocation4 [shape = 's32[2]{0}', space=sflag, size = 0x8, scoped, tag = 'scoped memory for tpu_custom_call.1']
    #allocation5 [shape = 's32[2]{0}', space=sflag, size = 0x8, scoped, tag = 'scoped memory for tpu_custom_call.1']
    #allocation6 [shape = 'u8[65536]{0}', space=vmem, size = 0x10000, scoped, tag = 'input window, operand 1, single buffered']
    #allocation7 [shape = 's32[1]{0}', space=sflag, size = 0x4, scoped, tag = 'scoped memory for tpu_custom_call.1']
    #allocation8 [shape = 'u8[4096]{0}', space=vmem, size = 0x1000, scoped, tag = 'output window, operand 0']
    %10 = vsyncpa [#allocation4], 0
    %s11 = scalar_lea.sflag [#allocation4], 1
    %12 = vsyncpa %s11, 0
    %13 = vsyncpa [#allocation7], 0
    %14 = vsyncpa [#allocation5], 0
    %s15 = scalar_lea.sflag [#allocation5], 1
    %16 = vsyncpa %s15, 0
    loop: start=0, step=1, limit=4
    $region2: #{tpu_custom_call.1} parent=1 // loop_pre_header
      _
    $region3: #{tpu_custom_call.1} parent=1 // loop_header
      %s18 = sphi 0, %s22
      %p19 = scmp.ge.s32.totalorder %s18, 4
      %s25 = sphi 0, %s37
      %s26 = sphi 0, %s33
      %s27 = sphi 0, %s25
      %s28 = sphi 0, %s26
      %s29 = sphi 0, %s27
      %s30 = sphi 0, %s28
      %s42 = sphi 0, %s44
      %s45 = sphi 0, %s42
      %s46 = sphi 0, %s45
      %s62 = sphi 0, %s46
      %s66 = sphi 0, %s66
      %s68 = sphi 0, %s66
      %s69 = sphi 0, %s68
      %s83 = sphi 0, %s69
      %s89 = sphi 0, %s91
      %s92 = sphi 0, %s89
      %s93 = sphi 0, %s92
      %s109 = sphi 0, %s93
      %s113 = sphi 0, %s113
      %s115 = sphi 0, %s113
      %s116 = sphi 0, %s115
      %s130 = sphi 0, %s116
      %s134 = sphi 0, %s134
      %s136 = sphi 0, %s134
      %s137 = sphi 0, %s136
      %s151 = sphi 0, %s137
      %s157 = sphi 0, %s159
      %s160 = sphi 0, %s157
      %s161 = sphi 0, %s160
      %s177 = sphi 0, %s161
    $region4: #{tpu_custom_call.1} parent=1 // loop_header_branch
      %21 = sbr.rel (%p19) target = $region8
    $region5: #{tpu_custom_call.1} parent=1 // loop_body
      %s23 = ssub.s32 %s18, 1
      %s24 = ssub.s32 %s18, 2
      %s31 = sadd.s32 1, %s26
      %p32 = scmp.ge.s32.totalorder %s31, 1
      %s33 = scalar_select %p32, 0, %s31
      %s34 = sadd.s32 1, %s25
      %s35 = scalar_select %p32, %s34, %s25
      %p36 = scmp.ge.s32.totalorder %s35, 2
      %s37 = scalar_select %p36, 0, %s35
      %s38 = ssub.s32 %s25, %s37
      %s39 = ssub.s32 %s26, %s33
      %s40 = sor.u32 %s38, %s39
      %p41 = scmp.eq.s32.totalorder %s40, 0
      %s43 = sadd.s32 %s42, 1
      %s44 = scalar_select %p41, %s42, %s43
      %p47 = pneg %p41
      %p48 = scmp.eq.s32.totalorder %s18, 1
      %p49 = por %p47, %p48
      %p50 = scmp.ne.s32.totalorder %s42, %s45
      %p51 = scmp.eq.s32.totalorder %s18, 0
      %p52 = por %p50, %p51
      %p53 = scmp.ne.s32.totalorder %s42, %s45
      %p54 = scmp.eq.s32.totalorder %s23, 1
      %p55 = por %p53, %p54
      %p56 = scmp.ne.s32.totalorder %s45, %s46
      %p57 = scmp.eq.s32.totalorder %s23, 0
      %p58 = por %p56, %p57
      %p59 = scmp.ne.s32.totalorder %s45, %s46
      %p60 = scmp.eq.s32.totalorder %s24, 1
      %p61 = por %p59, %p60
      %p63 = scmp.ne.s32.totalorder %s46, %s62
      %p64 = scmp.eq.s32.totalorder %s24, 0
      %p65 = por %p63, %p64
      %s67 = sadd.s32 %s66, 1
      %p70 = scmp.eq.s32.totalorder %s18, 1
      %p71 = scmp.ne.s32.totalorder %s66, %s68
      %p72 = scmp.eq.s32.totalorder %s18, 0
      %p73 = por %p71, %p72
      %p74 = scmp.ne.s32.totalorder %s66, %s68
      %p75 = scmp.eq.s32.totalorder %s23, 1
      %p76 = por %p74, %p75
      %p77 = scmp.ne.s32.totalorder %s68, %s69
      %p78 = scmp.eq.s32.totalorder %s23, 0
      %p79 = por %p77, %p78
      %p80 = scmp.ne.s32.totalorder %s68, %s69
      %p81 = scmp.eq.s32.totalorder %s24, 1
      %p82 = por %p80, %p81
      %p84 = scmp.ne.s32.totalorder %s69, %s83
      %p85 = scmp.eq.s32.totalorder %s24, 0
      %p86 = por %p84, %p85
      %s87 = ssub.s32 %s26, %s33
      %p88 = scmp.eq.s32.totalorder %s87, 0
      %s90 = sadd.s32 %s89, 1
      %s91 = scalar_select %p88, %s89, %s90
      %p94 = pneg %p88
      %p95 = scmp.eq.s32.totalorder %s18, 1
      %p96 = por %p94, %p95
      %p97 = scmp.ne.s32.totalorder %s89, %s92
      %p98 = scmp.eq.s32.totalorder %s18, 0
      %p99 = por %p97, %p98
      %p100 = scmp.ne.s32.totalorder %s89, %s92
      %p101 = scmp.eq.s32.totalorder %s23, 1
      %p102 = por %p100, %p101
      %p103 = scmp.ne.s32.totalorder %s92, %s93
      %p104 = scmp.eq.s32.totalorder %s23, 0
      %p105 = por %p103, %p104
      %p106 = scmp.ne.s32.totalorder %s92, %s93
      %p107 = scmp.eq.s32.totalorder %s24, 1
      %p108 = por %p106, %p107
      %p110 = scmp.ne.s32.totalorder %s93, %s109
      %p111 = scmp.eq.s32.totalorder %s24, 0
      %p112 = por %p110, %p111
      %s114 = sadd.s32 %s113, 1
      %p117 = scmp.eq.s32.totalorder %s18, 1
      %p118 = scmp.ne.s32.totalorder %s113, %s115
      %p119 = scmp.eq.s32.totalorder %s18, 0
      %p120 = por %p118, %p119
      %p121 = scmp.ne.s32.totalorder %s113, %s115
      %p122 = scmp.eq.s32.totalorder %s23, 1
      %p123 = por %p121, %p122
      %p124 = scmp.ne.s32.totalorder %s115, %s116
      %p125 = scmp.eq.s32.totalorder %s23, 0
      %p126 = por %p124, %p125
      %p127 = scmp.ne.s32.totalorder %s115, %s116
      %p128 = scmp.eq.s32.totalorder %s24, 1
      %p129 = por %p127, %p128
      %p131 = scmp.ne.s32.totalorder %s116, %s130
      %p132 = scmp.eq.s32.totalorder %s24, 0
      %p133 = por %p131, %p132
      %s135 = sadd.s32 %s134, 1
      %p138 = scmp.eq.s32.totalorder %s18, 1
      %p139 = scmp.ne.s32.totalorder %s134, %s136
      %p140 = scmp.eq.s32.totalorder %s18, 0
      %p141 = por %p139, %p140
      %p142 = scmp.ne.s32.totalorder %s134, %s136
      %p143 = scmp.eq.s32.totalorder %s23, 1
      %p144 = por %p142, %p143
      %p145 = scmp.ne.s32.totalorder %s136, %s137
      %p146 = scmp.eq.s32.totalorder %s23, 0
      %p147 = por %p145, %p146
      %p148 = scmp.ne.s32.totalorder %s136, %s137
      %p149 = scmp.eq.s32.totalorder %s24, 1
      %p150 = por %p148, %p149
      %p152 = scmp.ne.s32.totalorder %s137, %s151
      %p153 = scmp.eq.s32.totalorder %s24, 0
      %p154 = por %p152, %p153
      %s155 = ssub.s32 %s25, %s37
      %p156 = scmp.eq.s32.totalorder %s155, 0
      %s158 = sadd.s32 %s157, 1
      %s159 = scalar_select %p156, %s157, %s158
      %p162 = pneg %p156
      %p163 = scmp.eq.s32.totalorder %s18, 1
      %p164 = por %p162, %p163
      %p165 = scmp.ne.s32.totalorder %s157, %s160
      %p166 = scmp.eq.s32.totalorder %s18, 0
      %p167 = por %p165, %p166
      %p168 = scmp.ne.s32.totalorder %s157, %s160
      %p169 = scmp.eq.s32.totalorder %s23, 1
      %p170 = por %p168, %p169
      %p171 = scmp.ne.s32.totalorder %s160, %s161
      %p172 = scmp.eq.s32.totalorder %s23, 0
      %p173 = por %p171, %p172
      %p174 = scmp.ne.s32.totalorder %s160, %s161
      %p175 = scmp.eq.s32.totalorder %s24, 1
      %p176 = por %p174, %p175
      %p178 = scmp.ne.s32.totalorder %s161, %s177
      %p179 = scmp.eq.s32.totalorder %s24, 0
      %p180 = por %p178, %p179
      %p181 = scmp.le.s32.totalorder 1, %s18
      %p182 = scmp.lt.s32.totalorder %s18, 3
      %p183 = pnand %p181, %p182
      %p184 = pneg %p183
      // Predicated region
      $region9: #{tpu_custom_call.1} parent=5 // pred_check
        _
      $region10: #{tpu_custom_call.1} parent=5 // pred_check_branch
        %186 = sbr.rel (%p183) target = $region12
      $region11: #{tpu_custom_call.1} parent=5 // pred_region
        %s187 = ssub.s32 %s18, 1
        // Predicated region
        $region13: #{tpu_custom_call.1} parent=11 // pred_check
          %p188 = pneg %p79
        $region14: #{tpu_custom_call.1} parent=11 // pred_check_branch
          %190 = sbr.rel (%p188) target = $region16
        $region15: #{tpu_custom_call.1} parent=11 // pred_region
          %s192 = ssub.s32 2048, 2048
          %193 = vsyncadd [#allocation7], %s192
          %s194 = sshll.u32 [#allocation6], 4
          %s195 = int_to_ptr.vmem [resolvable:$true] %s194
          %200 = dma.hbm_to_vmem [thread:$0]  %s1, 2048, %s195, [#allocation7], 64, 64, 4
        $region16: #{tpu_custom_call.1} parent=11 // pred_fallthru
          _
        // Predicated region
        $region17: #{tpu_custom_call.1} parent=11 // pred_check
          %p201 = pneg %p105
        $region18: #{tpu_custom_call.1} parent=11 // pred_check_branch
          %203 = sbr.rel (%p201) target = $region20
        $region19: #{tpu_custom_call.1} parent=11 // pred_region
          %p204 = scmp.lt.s32.totalorder %s28, 0
          %s205 = scalar_select %p204, %s28, 0
          %s206 = smul.addr %s205, 4
          %s207 = scalar_lea.vmem %s2, %s206
        $region20: #{tpu_custom_call.1} parent=11 // pred_fallthru
          _
        // Predicated region
        $region21: #{tpu_custom_call.1} parent=11 // pred_check
          %p208 = pneg %p126
        $region22: #{tpu_custom_call.1} parent=11 // pred_check_branch
          %210 = sbr.rel (%p208) target = $region24
        $region23: #{tpu_custom_call.1} parent=11 // pred_region
          _
        $region24: #{tpu_custom_call.1} parent=11 // pred_fallthru
          _
        // Predicated region
        $region25: #{tpu_custom_call.1} parent=11 // pred_check
          %p211 = pneg %p147
        $region26: #{tpu_custom_call.1} parent=11 // pred_check_branch
          %213 = sbr.rel (%p211) target = $region28
        $region27: #{tpu_custom_call.1} parent=11 // pred_region
          _
        $region28: #{tpu_custom_call.1} parent=11 // pred_fallthru
          _
      $region12: #{tpu_custom_call.1} parent=5 // pred_fallthru
        _
      %p214 = scmp.lt.s32.totalorder %s18, 2
      // Predicated region
      $region29: #{tpu_custom_call.1} parent=5 // pred_check
        %p215 = pneg %p214
      $region30: #{tpu_custom_call.1} parent=5 // pred_check_branch
        %217 = sbr.rel (%p215) target = $region32
      $region31: #{tpu_custom_call.1} parent=5 // pred_region
        // Predicated region
        $region33: #{tpu_custom_call.1} parent=31 // pred_check
          %p218 = pneg %p52
        $region34: #{tpu_custom_call.1} parent=31 // pred_check_branch
          %220 = sbr.rel (%p218) target = $region36
        $region35: #{tpu_custom_call.1} parent=31 // pred_region
          %s221 = sand.u32 %s42, 1
          %s222 = scalar_lea.sflag [#allocation4], %s221
          %s223 = sand.u32 %s42, 1
          %s224 = smul.addr %s223, 16
          %s225 = scalar_lea.vmem [#allocation3], %s224
          %s227 = ssub.s32 256, 256
          %228 = vsyncadd %s222, %s227
          %s229 = smul.addr %s26, 2
          %s230 = smul.addr %s25, 2
          %s231 = sadd.s32 %s229, %s230
          %s232 = smul.addr %s231, 128
          %s233 = scalar_lea.hbm %s0, %s232
          %s235 = sshll.u32 %s225, 4
          %s236 = int_to_ptr.vmem [resolvable:$true] %s235
          %238 = dma.hbm_to_vmem [thread:$0]  %s233, 256, %s236, %s222
        $region36: #{tpu_custom_call.1} parent=31 // pred_fallthru
          _
      $region32: #{tpu_custom_call.1} parent=5 // pred_fallthru
        _
      %p239 = scmp.le.s32.totalorder 1, %s18
      %p240 = scmp.lt.s32.totalorder %s18, 3
      %p241 = pnand %p239, %p240
      %p242 = pneg %p241
      // Predicated region
      $region37: #{tpu_custom_call.1} parent=5 // pred_check
        _
      $region38: #{tpu_custom_call.1} parent=5 // pred_check_branch
        %244 = sbr.rel (%p241) target = $region40
      $region39: #{tpu_custom_call.1} parent=5 // pred_region
        %s245 = ssub.s32 %s18, 1
        %s246 = sand.u32 %s45, 1
        %s247 = scalar_lea.sflag [#allocation4], %s246
        %s248 = sand.u32 %s45, 1
        %s249 = smul.addr %s248, 16
        %s250 = scalar_lea.vmem [#allocation3], %s249
        // Predicated region
        $region41: #{tpu_custom_call.1} parent=39 // pred_check
          %p251 = pneg %p58
        $region42: #{tpu_custom_call.1} parent=39 // pred_check_branch
          %253 = sbr.rel (%p251) target = $region44
        $region43: #{tpu_custom_call.1} parent=39 // pred_region
          %254 = dma.done %s247, 256
        $region44: #{tpu_custom_call.1} parent=39 // pred_fallthru
          _
        // Predicated region
        $region45: #{tpu_custom_call.1} parent=39 // pred_check
          %p255 = pneg %p79
        $region46: #{tpu_custom_call.1} parent=39 // pred_check_branch
          %257 = sbr.rel (%p255) target = $region48
        $region47: #{tpu_custom_call.1} parent=39 // pred_region
          %258 = dma.done [#allocation7], 2048
        $region48: #{tpu_custom_call.1} parent=39 // pred_fallthru
          _
        %s259 = sand.u32 %s45, 1
        %s260 = scalar_lea.sflag [#allocation4], %s259
        %s261 = sand.u32 %s45, 1
        %s262 = smul.addr %s261, 16
        %s263 = scalar_lea.vmem [#allocation3], %s262
        %p264 = pneg %p58
        %p265 = pneg %p55
        %p266 = pneg %p79
        %p267 = pneg %p76
        %p268 = scmp.lt.s32.totalorder %s28, 0
        %s269 = scalar_select %p268, %s28, 0
        %s270 = smul.addr %s269, 4
        %s271 = scalar_lea.vmem %s2, %s270
        %p272 = pneg %p105
        %p273 = pneg %p102
        %p274 = pneg %p126
        %p275 = pneg %p123
        %p276 = pneg %p147
        %p277 = pneg %p144
        %p278 = pneg %p173
        %p279 = pneg %p170
        %s280 = sand.u32 %s160, 1
        %s281 = scalar_lea.sflag [#allocation5], %s280
        %s282 = sand.u32 %s160, 1
        %s283 = smul.addr %s282, 4
        %s284 = scalar_lea.vmem [#allocation8], %s283
        %p285 = scmp.lt.s32.totalorder %s28, 0
        %s286 = scalar_select %p285, %s28, 0
        %s287 = smul.addr %s286, 4
        %s288 = scalar_lea.vmem %s2, %s287
        %p290 = scmp.eq.s32.totalorder %s28, 0
        // Predicated region
        $region49: #{tpu_custom_call.1} parent=39 // pred_check
          %p291 = pneg %p290
        $region50: #{tpu_custom_call.1} parent=39 // pred_check_branch
          %293 = sbr.rel (%p291) target = $region52
        $region51: #{tpu_custom_call.1} parent=39 // pred_region
          %294 = vst [vmem:[#allocation2] sm:$0xff] 0.0
        $region52: #{tpu_custom_call.1} parent=39 // pred_fallthru
          _
        %v295 = vld [vmem:[%s250] sm:$0xff]
        %v296 = vld [vmem:[%s250 + $0x8] sm:$0xff]
        %v297 = vpack.c.bf16 %v295, %v295
        %v298 = vpack.c.bf16 %v296, %v296
        %v299 = vld [vmem:[#allocation6] sm:$0xf]
        %v300 = vld [vmem:[#allocation6 + $0x4] sm:$0xf]
        %v301 = vld [vmem:[#allocation6 + $0x8] sm:$0xf]
        %v302 = vld [vmem:[#allocation6 + $0xc] sm:$0xf]
        %v303 = vld [vmem:[#allocation6 + $0x10] sm:$0xf]
        %v304 = vld [vmem:[#allocation6 + $0x14] sm:$0xf]
        %v305 = vld [vmem:[#allocation6 + $0x18] sm:$0xf]
        %v306 = vld [vmem:[#allocation6 + $0x1c] sm:$0xf]
        %v307 = vld [vmem:[#allocation6 + $0x20] sm:$0xf]
        %v308 = vld [vmem:[#allocation6 + $0x24] sm:$0xf]
        %v309 = vld [vmem:[#allocation6 + $0x28] sm:$0xf]
        %v310 = vld [vmem:[#allocation6 + $0x2c] sm:$0xf]
        %v311 = vld [vmem:[#allocation6 + $0x30] sm:$0xf]
        %v312 = vld [vmem:[#allocation6 + $0x34] sm:$0xf]
        %v313 = vld [vmem:[#allocation6 + $0x38] sm:$0xf]
        %v314 = vld [vmem:[#allocation6 + $0x3c] sm:$0xf]
        %v315 = vld [vmem:[#allocation6 + $0x40] sm:$0xf]
        %v316 = vld [vmem:[#allocation6 + $0x44] sm:$0xf]
        %v317 = vld [vmem:[#allocation6 + $0x48] sm:$0xf]
        %v318 = vld [vmem:[#allocation6 + $0x4c] sm:$0xf]
        %v319 = vld [vmem:[#allocation6 + $0x50] sm:$0xf]
        %v320 = vld [vmem:[#allocation6 + $0x54] sm:$0xf]
        %v321 = vld [vmem:[#allocation6 + $0x58] sm:$0xf]
        %v322 = vld [vmem:[#allocation6 + $0x5c] sm:$0xf]
        %v323 = vld [vmem:[#allocation6 + $0x60] sm:$0xf]
        %v324 = vld [vmem:[#allocation6 + $0x64] sm:$0xf]
        %v325 = vld [vmem:[#allocation6 + $0x68] sm:$0xf]
        %v326 = vld [vmem:[#allocation6 + $0x6c] sm:$0xf]
        %v327 = vld [vmem:[#allocation6 + $0x70] sm:$0xf]
        %v328 = vld [vmem:[#allocation6 + $0x74] sm:$0xf]
        %v329 = vld [vmem:[#allocation6 + $0x78] sm:$0xf]
        %v330 = vld [vmem:[#allocation6 + $0x7c] sm:$0xf]
        %v363 = vunpack.c.l.b16 %v299
        %v364 = vunpack.c.l.b16 %v300
        %v365 = vunpack.c.l.b16 %v301
        %v366 = vunpack.c.l.b16 %v302
        %v367 = vunpack.c.l.b16 %v303
        %v368 = vunpack.c.l.b16 %v304
        %v369 = vunpack.c.l.b16 %v305
        %v370 = vunpack.c.l.b16 %v306
        %v371 = vunpack.c.l.b16 %v307
        %v372 = vunpack.c.l.b16 %v308
        %v373 = vunpack.c.l.b16 %v309
        %v374 = vunpack.c.l.b16 %v310
        %v375 = vunpack.c.l.b16 %v311
        %v376 = vunpack.c.l.b16 %v312
        %v377 = vunpack.c.l.b16 %v313
        %v378 = vunpack.c.l.b16 %v314
        %v379 = vunpack.c.l.b16 %v315
        %v380 = vunpack.c.l.b16 %v316
        %v381 = vunpack.c.l.b16 %v317
        %v382 = vunpack.c.l.b16 %v318
        %v383 = vunpack.c.l.b16 %v319
        %v384 = vunpack.c.l.b16 %v320
        %v385 = vunpack.c.l.b16 %v321
        %v386 = vunpack.c.l.b16 %v322
        %v387 = vunpack.c.l.b16 %v323
        %v388 = vunpack.c.l.b16 %v324
        %v389 = vunpack.c.l.b16 %v325
        %v390 = vunpack.c.l.b16 %v326
        %v391 = vunpack.c.l.b16 %v327
        %v392 = vunpack.c.l.b16 %v328
        %v393 = vunpack.c.l.b16 %v329
        %v394 = vunpack.c.l.b16 %v330
        %v395 = vpack.c.b16 %v364, %v363
        %v396 = vpack.c.b16 %v366, %v365
        %v397 = vpack.c.b16 %v368, %v367
        %v398 = vpack.c.b16 %v370, %v369
        %v399 = vpack.c.b16 %v372, %v371
        %v400 = vpack.c.b16 %v374, %v373
        %v401 = vpack.c.b16 %v376, %v375
        %v402 = vpack.c.b16 %v378, %v377
        %v403 = vpack.c.b16 %v380, %v379
        %v404 = vpack.c.b16 %v382, %v381
        %v405 = vpack.c.b16 %v384, %v383
        %v406 = vpack.c.b16 %v386, %v385
        %v407 = vpack.c.b16 %v388, %v387
        %v408 = vpack.c.b16 %v390, %v389
        %v409 = vpack.c.b16 %v392, %v391
        %v410 = vpack.c.b16 %v394, %v393
        %427 = vmatprep.subr.bf16.mxu0 0
        %428 = vmatpush1.bf16.msra.mxu0 %v402
        %429 = vmatprep.subr.bf16.mxu0 0
        %430 = vmatpush1.bf16.msra.mxu0 %v401
        %431 = vmatprep.subr.bf16.mxu0 0
        %432 = vmatpush1.bf16.msra.mxu0 %v400
        %433 = vmatprep.subr.bf16.mxu0 0
        %434 = vmatpush1.bf16.msra.mxu0 %v399
        %435 = vmatprep.subr.bf16.mxu0 0
        %436 = vmatpush1.bf16.msra.mxu0 %v398
        %437 = vmatprep.subr.bf16.mxu0 0
        %438 = vmatpush1.bf16.msra.mxu0 %v397
        %439 = vmatprep.subr.bf16.mxu0 0
        %440 = vmatpush1.bf16.msra.mxu0 %v396
        %441 = vmatprep.subr.bf16.mxu0 0
        %442 = vmatpush1.bf16.msra.mxu0 %v395
        %443 = vmatprep.subr.bf16.mxu0 0
        %444 = vmatpush2.bf16.msra.mxu0 %v410
        %445 = vmatprep.subr.bf16.mxu0 0
        %446 = vmatpush2.bf16.msra.mxu0 %v409
        %447 = vmatprep.subr.bf16.mxu0 0
        %448 = vmatpush2.bf16.msra.mxu0 %v408
        %449 = vmatprep.subr.bf16.mxu0 0
        %450 = vmatpush2.bf16.msra.mxu0 %v407
        %451 = vmatprep.subr.bf16.mxu0 0
        %452 = vmatpush2.bf16.msra.mxu0 %v406
        %453 = vmatprep.subr.bf16.mxu0 0
        %454 = vmatpush2.bf16.msra.mxu0 %v405
        %455 = vmatprep.subr.bf16.mxu0 0
        %456 = vmatpush2.bf16.msra.mxu0 %v404
        %457 = vmatprep.subr.bf16.mxu0 0
        %458 = vmatpush2.bf16.msra.mxu0 %v403
        %459 = vmatprep.mubr.bf16.mxu0 %v298
        %460 = vmatmul.mubr.bf16.gmra.mxu0 %v297
        %v461 = vpop.f32.mrf.mxu0
        %v462 = vadd.f32 0.0, %v461
        %v463 = vpop.f32.mrf.mxu0
        %v464 = vpop.f32.mrf.mxu0
        %v465 = vpop.f32.mrf.mxu0
        %466 = vdwg.mxu0
        %v467 = vld [vmem:[#allocation2] sm:$0xff]
        %v468 = vld [vmem:[%s288] sm:$0xf]
        %v469 = vpack.c.bf16 %v462, %v462
        %vm470 = vcmask 64512
        %v472 = vsel %vm470, %v468, 0
        %vm474 = vcmask 1043456
        %v476 = vsel %vm474, %v469, 0
        %478 = vmatprep.subr.bf16.mxu0 0
        %479 = vmatpush1.bf16.msra.mxu0 0
        %480 = vmatprep.subr.bf16.mxu0 0
        %481 = vmatpush1.bf16.msra.mxu0 0
        %482 = vmatprep.subr.bf16.mxu0 0
        %483 = vmatpush1.bf16.msra.mxu0 0
        %484 = vmatprep.subr.bf16.mxu0 0
        %485 = vmatpush1.bf16.msra.mxu0 0
        %486 = vmatprep.subr.bf16.mxu0 0
        %487 = vmatpush1.bf16.msra.mxu0 0
        %488 = vmatprep.subr.bf16.mxu0 0
        %489 = vmatpush1.bf16.msra.mxu0 0
        %490 = vmatprep.subr.bf16.mxu0 0
        %491 = vmatpush1.bf16.msra.mxu0 0
        %492 = vmatprep.subr.bf16.mxu0 0
        %493 = vmatpush1.bf16.msra.mxu0 %v476
        %494 = vmatprep.subr.bf16.mxu0 0
        %495 = vmatpush2.bf16.msra.mxu0 0
        %496 = vmatprep.subr.bf16.mxu0 0
        %497 = vmatpush2.bf16.msra.mxu0 0
        %498 = vmatprep.subr.bf16.mxu0 0
        %499 = vmatpush2.bf16.msra.mxu0 0
        %500 = vmatprep.subr.bf16.mxu0 0
        %501 = vmatpush2.bf16.msra.mxu0 0
        %502 = vmatprep.subr.bf16.mxu0 0
        %503 = vmatpush2.bf16.msra.mxu0 0
        %504 = vmatprep.subr.bf16.mxu0 0
        %505 = vmatpush2.bf16.msra.mxu0 0
        %506 = vmatprep.subr.bf16.mxu0 0
        %507 = vmatpush2.bf16.msra.mxu0 0
        %508 = vmatprep.subr.bf16.mxu0 0
        %509 = vmatpush2.bf16.msra.mxu0 0
        %510 = vmatprep.mubr.bf16.mxu0 0
        %511 = vmatmul.mubr.bf16.gmra.mxu0 %v472
        %v512 = vpop.f32.mrf.mxu0
        %v513 = vadd.f32 0.0, %v512
        %v514 = vpop.f32.mrf.mxu0
        %v515 = vpop.f32.mrf.mxu0
        %v516 = vpop.f32.mrf.mxu0
        %517 = vdwg.mxu0
        %v518 = vadd.f32 %v467, %v513
        %519 = vst [vmem:[#allocation2] sm:$0xff] %v518
        // Predicated region
        $region53: #{tpu_custom_call.1} parent=39 // pred_check
          %p520 = pneg %p290
        $region54: #{tpu_custom_call.1} parent=39 // pred_check_branch
          %522 = sbr.rel (%p520) target = $region56
        $region55: #{tpu_custom_call.1} parent=39 // pred_region
          %v523 = vld [vmem:[#allocation2] sm:$0xff]
          %v524 = vld [vmem:[%s3] sm:$0xff]
          %526 = vset.pattern.permute.xlu0 0
          %527 = vperm.xlu0 %526, %v524
          %v528 = vpop.permute.xlu0 %527
          %v530 = vadd.f32 %v523, %v528
          %v531 = vmax.f32 %v530, 0.0
          %v532 = vld [vmem:[%s4] sm:$0xff]
          %v533 = vmul.f32 %v531, %v532
          %v534 = vpack.c.bf16 %v533, %v533
          %535 = vst [vmem:[%s284] sm:$0xf] %v534
        $region56: #{tpu_custom_call.1} parent=39 // pred_fallthru
          _
        %s536 = sand.u32 %s160, 1
        %s537 = scalar_lea.sflag [#allocation5], %s536
        %s538 = sand.u32 %s160, 1
        %s539 = smul.addr %s538, 4
        %s540 = scalar_lea.vmem [#allocation8], %s539
        // Predicated region
        $region57: #{tpu_custom_call.1} parent=39 // pred_check
          %p541 = pneg %p170
        $region58: #{tpu_custom_call.1} parent=39 // pred_check_branch
          %543 = sbr.rel (%p541) target = $region60
        $region59: #{tpu_custom_call.1} parent=39 // pred_region
          %s545 = ssub.s32 64, 64
          %546 = vsyncadd %s537, %s545
          %s547 = smul.addr %s27, 64
          %s548 = scalar_lea.hbm %s5, %s547
          %s550 = sshll.u32 %s540, 4
          %s551 = int_to_ptr.vmem [resolvable:$true] %s550
          %553 = dma.vmem_to_hbm [thread:$0]  %s551, 64, %s548, %s537
        $region60: #{tpu_custom_call.1} parent=39 // pred_fallthru
          _
      $region40: #{tpu_custom_call.1} parent=5 // pred_fallthru
        _
      %p554 = scmp.le.s32.totalorder 2, %s18
      // Predicated region
      $region61: #{tpu_custom_call.1} parent=5 // pred_check
        %p555 = pneg %p554
      $region62: #{tpu_custom_call.1} parent=5 // pred_check_branch
        %557 = sbr.rel (%p555) target = $region64
      $region63: #{tpu_custom_call.1} parent=5 // pred_region
        %s558 = ssub.s32 %s18, 2
        // Predicated region
        $region65: #{tpu_custom_call.1} parent=63 // pred_check
          %p559 = pneg %p176
        $region66: #{tpu_custom_call.1} parent=63 // pred_check_branch
          %561 = sbr.rel (%p559) target = $region68
        $region67: #{tpu_custom_call.1} parent=63 // pred_region
          %s562 = sand.u32 %s161, 1
          %s563 = scalar_lea.sflag [#allocation5], %s562
          %s564 = sand.u32 %s161, 1
          %s565 = smul.addr %s564, 4
          %s566 = scalar_lea.vmem [#allocation8], %s565
          %567 = dma.done %s563, 64
        $region68: #{tpu_custom_call.1} parent=63 // pred_fallthru
          _
      $region64: #{tpu_custom_call.1} parent=5 // pred_fallthru
        _
    $region6: #{tpu_custom_call.1} parent=1 // loop_footer
      %s22 = sadd.s32 1, %s18
    $region7: #{tpu_custom_call.1} parent=1 // loop_footer_branch
      %17 = sbr.rel target = $region3
    $region8: #{tpu_custom_call.1} parent=1 // loop_exit
      _
    %568 = vsyncpa [#allocation4], 1
    %s569 = scalar_lea.sflag [#allocation4], 1
    %570 = vsyncpa %s569, 1
    %571 = vsyncpa [#allocation7], 1
    %572 = vsyncpa [#allocation5], 1
    %s573 = scalar_lea.sflag [#allocation5], 1
    %574 = vsyncpa %s573, 1

// kernel: tpu_custom_call.1
$region0: #{tpu_custom_call.1}
  #allocation0 [shape = 'u32[]', space=smem, size = 0x4, offset = 0x4, fixed_abs, tag = 'smem constant byte address 0x4 - core index']
  #allocation1 [shape = 'u32[144,128]{1,0:T(1,128)}', space=vmem, size = 0x12000, scoped, tag = 'internal scratch']
  #allocation2 [shape = 'f32[8,128]{1,0:T(8,128)}', space=vmem, size = 0x1000, scoped, tag = 'scratch operand']
  %s0 = inlined_call_operand.hbm [shape: f32[2,8,256], index: 0, kind: input, shape index: {}]
  %s1 = inlined_call_operand.hbm [shape: bf16[256,128], index: 1, kind: input, shape index: {}]
  %s2 = inlined_call_operand.vmem [shape: bf16[8,8], index: 2, kind: input, shape index: {}]
  %s3 = inlined_call_operand.vmem [shape: f32[8,1], index: 3, kind: input, shape index: {}]
  %s4 = inlined_call_operand.vmem [shape: f32[8,128], index: 4, kind: input, shape index: {}]
  %s5 = inlined_call_operand.hbm [shape: bf16[2,8,128], index: 5, kind: output, shape index: {}]
  %s6 = sld [smem:[#allocation0]]
  $region69: #{tpu_custom_call.1} parent=0
    _
  %s8 = ssub.s32 1, %s6
  %s9 = scalar_select 0, %s8, %s6
  $region1: #{tpu_custom_call.1} parent=0
    #allocation3 [shape = 'u8[16384]{0}', space=vmem, size = 0x4000, scoped, tag = 'input window, operand 0']
    #allocation4 [shape = 's32[2]{0}', space=sflag, size = 0x8, scoped, tag = 'scoped memory for tpu_custom_call.1']
    #allocation5 [shape = 's32[2]{0}', space=sflag, size = 0x8, scoped, tag = 'scoped memory for tpu_custom_call.1']
    #allocation6 [shape = 'u8[65536]{0}', space=vmem, size = 0x10000, scoped, tag = 'input window, operand 1, single buffered']
    #allocation7 [shape = 's32[1]{0}', space=sflag, size = 0x4, scoped, tag = 'scoped memory for tpu_custom_call.1']
    #allocation8 [shape = 'u8[4096]{0}', space=vmem, size = 0x1000, scoped, tag = 'output window, operand 0']
    %10 = vsyncpa [#allocation4], 0
    %s11 = scalar_lea.sflag [#allocation4], 1
    %12 = vsyncpa %s11, 0
    %13 = vsyncpa [#allocation7], 0
    %14 = vsyncpa [#allocation5], 0
    %s15 = scalar_lea.sflag [#allocation5], 1
    %16 = vsyncpa %s15, 0
    loop: start=0, step=1, limit=4
    $region2: #{tpu_custom_call.1} parent=1 // loop_pre_header
      _
    $region3: #{tpu_custom_call.1} parent=1 // loop_header
      %s18 = sphi 0, %s22
      %p19 = scmp.ge.s32.totalorder %s18, 4
      %s25 = sphi 0, %s37
      %s26 = sphi 0, %s33
      %s27 = sphi 0, %s25
      %s28 = sphi 0, %s26
      %s29 = sphi 0, %s27
      %s30 = sphi 0, %s28
      %s42 = sphi 0, %s44
      %s45 = sphi 0, %s42
      %s46 = sphi 0, %s45
      %s62 = sphi 0, %s46
      %s66 = sphi 0, %s66
      %s68 = sphi 0, %s66
      %s69 = sphi 0, %s68
      %s83 = sphi 0, %s69
      %s89 = sphi 0, %s91
      %s92 = sphi 0, %s89
      %s93 = sphi 0, %s92
      %s109 = sphi 0, %s93
      %s113 = sphi 0, %s113
      %s115 = sphi 0, %s113
      %s116 = sphi 0, %s115
      %s130 = sphi 0, %s116
      %s134 = sphi 0, %s134
      %s136 = sphi 0, %s134
      %s137 = sphi 0, %s136
      %s151 = sphi 0, %s137
      %s157 = sphi 0, %s159
      %s160 = sphi 0, %s157
      %s161 = sphi 0, %s160
      %s177 = sphi 0, %s161
    $region4: #{tpu_custom_call.1} parent=1 // loop_header_branch
      %21 = sbr.rel (%p19) target = $region8
    $region5: #{tpu_custom_call.1} parent=1 // loop_body
      %s23 = ssub.s32 %s18, 1
      %s24 = ssub.s32 %s18, 2
      %s31 = sadd.s32 1, %s26
      %p32 = scmp.ge.s32.totalorder %s31, 1
      %s33 = scalar_select %p32, 0, %s31
      %s34 = sadd.s32 1, %s25
      %s35 = scalar_select %p32, %s34, %s25
      %p36 = scmp.ge.s32.totalorder %s35, 2
      %s37 = scalar_select %p36, 0, %s35
      %s38 = ssub.s32 %s25, %s37
      %s39 = ssub.s32 %s26, %s33
      %s40 = sor.u32 %s38, %s39
      %p41 = scmp.eq.s32.totalorder %s40, 0
      %s43 = sadd.s32 %s42, 1
      %s44 = scalar_select %p41, %s42, %s43
      %p47 = pneg %p41
      %p48 = scmp.eq.s32.totalorder %s18, 1
      %p49 = por %p47, %p48
      %p50 = scmp.ne.s32.totalorder %s42, %s45
      %p51 = scmp.eq.s32.totalorder %s18, 0
      %p52 = por %p50, %p51
      %p53 = scmp.ne.s32.totalorder %s42, %s45
      %p54 = scmp.eq.s32.totalorder %s23, 1
      %p55 = por %p53, %p54
      %p56 = scmp.ne.s32.totalorder %s45, %s46
      %p57 = scmp.eq.s32.totalorder %s23, 0
      %p58 = por %p56, %p57
      %p59 = scmp.ne.s32.totalorder %s45, %s46
      %p60 = scmp.eq.s32.totalorder %s24, 1
      %p61 = por %p59, %p60
      %p63 = scmp.ne.s32.totalorder %s46, %s62
      %p64 = scmp.eq.s32.totalorder %s24, 0
      %p65 = por %p63, %p64
      %s67 = sadd.s32 %s66, 1
      %p70 = scmp.eq.s32.totalorder %s18, 1
      %p71 = scmp.ne.s32.totalorder %s66, %s68
      %p72 = scmp.eq.s32.totalorder %s18, 0
      %p73 = por %p71, %p72
      %p74 = scmp.ne.s32.totalorder %s66, %s68
      %p75 = scmp.eq.s32.totalorder %s23, 1
      %p76 = por %p74, %p75
      %p77 = scmp.ne.s32.totalorder %s68, %s69
      %p78 = scmp.eq.s32.totalorder %s23, 0
      %p79 = por %p77, %p78
      %p80 = scmp.ne.s32.totalorder %s68, %s69
      %p81 = scmp.eq.s32.totalorder %s24, 1
      %p82 = por %p80, %p81
      %p84 = scmp.ne.s32.totalorder %s69, %s83
      %p85 = scmp.eq.s32.totalorder %s24, 0
      %p86 = por %p84, %p85
      %s87 = ssub.s32 %s26, %s33
      %p88 = scmp.eq.s32.totalorder %s87, 0
      %s90 = sadd.s32 %s89, 1
      %s91 = scalar_select %p88, %s89, %s90
      %p94 = pneg %p88
      %p95 = scmp.eq.s32.totalorder %s18, 1
      %p96 = por %p94, %p95
      %p97 = scmp.ne.s32.totalorder %s89, %s92
      %p98 = scmp.eq.s32.totalorder %s18, 0
      %p99 = por %p97, %p98
      %p100 = scmp.ne.s32.totalorder %s89, %s92
      %p101 = scmp.eq.s32.totalorder %s23, 1
      %p102 = por %p100, %p101
      %p103 = scmp.ne.s32.totalorder %s92, %s93
      %p104 = scmp.eq.s32.totalorder %s23, 0
      %p105 = por %p103, %p104
      %p106 = scmp.ne.s32.totalorder %s92, %s93
      %p107 = scmp.eq.s32.totalorder %s24, 1
      %p108 = por %p106, %p107
      %p110 = scmp.ne.s32.totalorder %s93, %s109
      %p111 = scmp.eq.s32.totalorder %s24, 0
      %p112 = por %p110, %p111
      %s114 = sadd.s32 %s113, 1
      %p117 = scmp.eq.s32.totalorder %s18, 1
      %p118 = scmp.ne.s32.totalorder %s113, %s115
      %p119 = scmp.eq.s32.totalorder %s18, 0
      %p120 = por %p118, %p119
      %p121 = scmp.ne.s32.totalorder %s113, %s115
      %p122 = scmp.eq.s32.totalorder %s23, 1
      %p123 = por %p121, %p122
      %p124 = scmp.ne.s32.totalorder %s115, %s116
      %p125 = scmp.eq.s32.totalorder %s23, 0
      %p126 = por %p124, %p125
      %p127 = scmp.ne.s32.totalorder %s115, %s116
      %p128 = scmp.eq.s32.totalorder %s24, 1
      %p129 = por %p127, %p128
      %p131 = scmp.ne.s32.totalorder %s116, %s130
      %p132 = scmp.eq.s32.totalorder %s24, 0
      %p133 = por %p131, %p132
      %s135 = sadd.s32 %s134, 1
      %p138 = scmp.eq.s32.totalorder %s18, 1
      %p139 = scmp.ne.s32.totalorder %s134, %s136
      %p140 = scmp.eq.s32.totalorder %s18, 0
      %p141 = por %p139, %p140
      %p142 = scmp.ne.s32.totalorder %s134, %s136
      %p143 = scmp.eq.s32.totalorder %s23, 1
      %p144 = por %p142, %p143
      %p145 = scmp.ne.s32.totalorder %s136, %s137
      %p146 = scmp.eq.s32.totalorder %s23, 0
      %p147 = por %p145, %p146
      %p148 = scmp.ne.s32.totalorder %s136, %s137
      %p149 = scmp.eq.s32.totalorder %s24, 1
      %p150 = por %p148, %p149
      %p152 = scmp.ne.s32.totalorder %s137, %s151
      %p153 = scmp.eq.s32.totalorder %s24, 0
      %p154 = por %p152, %p153
      %s155 = ssub.s32 %s25, %s37
      %p156 = scmp.eq.s32.totalorder %s155, 0
      %s158 = sadd.s32 %s157, 1
      %s159 = scalar_select %p156, %s157, %s158
      %p162 = pneg %p156
      %p163 = scmp.eq.s32.totalorder %s18, 1
      %p164 = por %p162, %p163
      %p165 = scmp.ne.s32.totalorder %s157, %s160
      %p166 = scmp.eq.s32.totalorder %s18, 0
      %p167 = por %p165, %p166
      %p168 = scmp.ne.s32.totalorder %s157, %s160
      %p169 = scmp.eq.s32.totalorder %s23, 1
      %p170 = por %p168, %p169
      %p171 = scmp.ne.s32.totalorder %s160, %s161
      %p172 = scmp.eq.s32.totalorder %s23, 0
      %p173 = por %p171, %p172
      %p174 = scmp.ne.s32.totalorder %s160, %s161
      %p175 = scmp.eq.s32.totalorder %s24, 1
      %p176 = por %p174, %p175
      %p178 = scmp.ne.s32.totalorder %s161, %s177
      %p179 = scmp.eq.s32.totalorder %s24, 0
      %p180 = por %p178, %p179
      %p181 = scmp.le.s32.totalorder 1, %s18
      %p182 = scmp.lt.s32.totalorder %s18, 3
      %p183 = pnand %p181, %p182
      %p184 = pneg %p183
      // Predicated region
      $region9: #{tpu_custom_call.1} parent=5 // pred_check
        _
      $region10: #{tpu_custom_call.1} parent=5 // pred_check_branch
        %186 = sbr.rel (%p183) target = $region12
      $region11: #{tpu_custom_call.1} parent=5 // pred_region
        %s187 = ssub.s32 %s18, 1
        // Predicated region
        $region13: #{tpu_custom_call.1} parent=11 // pred_check
          %p188 = pneg %p79
        $region14: #{tpu_custom_call.1} parent=11 // pred_check_branch
          %190 = sbr.rel (%p188) target = $region16
        $region15: #{tpu_custom_call.1} parent=11 // pred_region
          %s192 = ssub.s32 2048, 2048
          %193 = vsyncadd [#allocation7], %s192
          %s194 = sshll.u32 [#allocation6], 4
          %s195 = int_to_ptr.vmem [resolvable:$true] %s194
          %200 = dma.hbm_to_vmem [thread:$0]  %s1, 2048, %s195, [#allocation7], 64, 64, 4
        $region16: #{tpu_custom_call.1} parent=11 // pred_fallthru
          _
        // Predicated region
        $region17: #{tpu_custom_call.1} parent=11 // pred_check
          %p201 = pneg %p105
        $region18: #{tpu_custom_call.1} parent=11 // pred_check_branch
          %203 = sbr.rel (%p201) target = $region20
        $region19: #{tpu_custom_call.1} parent=11 // pred_region
          %p204 = scmp.lt.s32.totalorder %s28, 0
          %s205 = scalar_select %p204, %s28, 0
          %s206 = smul.addr %s205, 4
          %s207 = scalar_lea.vmem %s2, %s206
        $region20: #{tpu_custom_call.1} parent=11 // pred_fallthru
          _
        // Predicated region
        $region21: #{tpu_custom_call.1} parent=11 // pred_check
          %p208 = pneg %p126
        $region22: #{tpu_custom_call.1} parent=11 // pred_check_branch
          %210 = sbr.rel (%p208) target = $region24
        $region23: #{tpu_custom_call.1} parent=11 // pred_region
          _
        $region24: #{tpu_custom_call.1} parent=11 // pred_fallthru
          _
        // Predicated region
        $region25: #{tpu_custom_call.1} parent=11 // pred_check
          %p211 = pneg %p147
        $region26: #{tpu_custom_call.1} parent=11 // pred_check_branch
          %213 = sbr.rel (%p211) target = $region28
        $region27: #{tpu_custom_call.1} parent=11 // pred_region
          _
        $region28: #{tpu_custom_call.1} parent=11 // pred_fallthru
          _
      $region12: #{tpu_custom_call.1} parent=5 // pred_fallthru
        _
      %p214 = scmp.lt.s32.totalorder %s18, 2
      // Predicated region
      $region29: #{tpu_custom_call.1} parent=5 // pred_check
        %p215 = pneg %p214
      $region30: #{tpu_custom_call.1} parent=5 // pred_check_branch
        %217 = sbr.rel (%p215) target = $region32
      $region31: #{tpu_custom_call.1} parent=5 // pred_region
        // Predicated region
        $region33: #{tpu_custom_call.1} parent=31 // pred_check
          %p218 = pneg %p52
        $region34: #{tpu_custom_call.1} parent=31 // pred_check_branch
          %220 = sbr.rel (%p218) target = $region36
        $region35: #{tpu_custom_call.1} parent=31 // pred_region
          %s221 = sand.u32 %s42, 1
          %s222 = scalar_lea.sflag [#allocation4], %s221
          %s223 = sand.u32 %s42, 1
          %s224 = smul.addr %s223, 16
          %s225 = scalar_lea.vmem [#allocation3], %s224
          %s227 = ssub.s32 256, 256
          %228 = vsyncadd %s222, %s227
          %s229 = smul.addr %s26, 2
          %s230 = smul.addr %s25, 2
          %s231 = sadd.s32 %s229, %s230
          %s232 = smul.addr %s231, 128
          %s233 = scalar_lea.hbm %s0, %s232
          %s235 = sshll.u32 %s225, 4
          %s236 = int_to_ptr.vmem [resolvable:$true] %s235
          %238 = dma.hbm_to_vmem [thread:$0]  %s233, 256, %s236, %s222
        $region36: #{tpu_custom_call.1} parent=31 // pred_fallthru
          _
      $region32: #{tpu_custom_call.1} parent=5 // pred_fallthru
        _
      %p239 = scmp.le.s32.totalorder 1, %s18
      %p240 = scmp.lt.s32.totalorder %s18, 3
      %p241 = pnand %p239, %p240
      %p242 = pneg %p241
      // Predicated region
      $region37: #{tpu_custom_call.1} parent=5 // pred_check
        _
      $region38: #{tpu_custom_call.1} parent=5 // pred_check_branch
        %244 = sbr.rel (%p241) target = $region40
      $region39: #{tpu_custom_call.1} parent=5 // pred_region
        %s245 = ssub.s32 %s18, 1
        %s246 = sand.u32 %s45, 1
        %s247 = scalar_lea.sflag [#allocation4], %s246
        %s248 = sand.u32 %s45, 1
        %s249 = smul.addr %s248, 16
        %s250 = scalar_lea.vmem [#allocation3], %s249
        // Predicated region
        $region41: #{tpu_custom_call.1} parent=39 // pred_check
          %p251 = pneg %p58
        $region42: #{tpu_custom_call.1} parent=39 // pred_check_branch
          %253 = sbr.rel (%p251) target = $region44
        $region43: #{tpu_custom_call.1} parent=39 // pred_region
          %254 = dma.done %s247, 256
        $region44: #{tpu_custom_call.1} parent=39 // pred_fallthru
          _
        // Predicated region
        $region45: #{tpu_custom_call.1} parent=39 // pred_check
          %p255 = pneg %p79
        $region46: #{tpu_custom_call.1} parent=39 // pred_check_branch
          %257 = sbr.rel (%p255) target = $region48
        $region47: #{tpu_custom_call.1} parent=39 // pred_region
          %258 = dma.done [#allocation7], 2048
        $region48: #{tpu_custom_call.1} parent=39 // pred_fallthru
          _
        %s259 = sand.u32 %s45, 1
        %s260 = scalar_lea.sflag [#allocation4], %s259
        %s261 = sand.u32 %s45, 1
        %s262 = smul.addr %s261, 16
        %s263 = scalar_lea.vmem [#allocation3], %s262
        %p264 = pneg %p58
        %p265 = pneg %p55
        %p266 = pneg %p79
        %p267 = pneg %p76
        %p268 = scmp.lt.s32.totalorder %s28, 0
        %s269 = scalar_select %p268, %s28, 0
        %s270 = smul.addr %s269, 4
        %s271 = scalar_lea.vmem %s2, %s270
        %p272 = pneg %p105
        %p273 = pneg %p102
        %p274 = pneg %p126
        %p275 = pneg %p123
        %p276 = pneg %p147
        %p277 = pneg %p144
        %p278 = pneg %p173
        %p279 = pneg %p170
        %s280 = sand.u32 %s160, 1
        %s281 = scalar_lea.sflag [#allocation5], %s280
        %s282 = sand.u32 %s160, 1
        %s283 = smul.addr %s282, 4
        %s284 = scalar_lea.vmem [#allocation8], %s283
        %p285 = scmp.lt.s32.totalorder %s28, 0
        %s286 = scalar_select %p285, %s28, 0
        %s287 = smul.addr %s286, 4
        %s288 = scalar_lea.vmem %s2, %s287
        %p290 = scmp.eq.s32.totalorder %s28, 0
        // Predicated region
        $region49: #{tpu_custom_call.1} parent=39 // pred_check
          %p291 = pneg %p290
        $region50: #{tpu_custom_call.1} parent=39 // pred_check_branch
          %293 = sbr.rel (%p291) target = $region52
        $region51: #{tpu_custom_call.1} parent=39 // pred_region
          %294 = vst [vmem:[#allocation2] sm:$0xff] 0.0
        $region52: #{tpu_custom_call.1} parent=39 // pred_fallthru
          _
        %v295 = vld [vmem:[%s250] sm:$0xff]
        %v296 = vld [vmem:[%s250 + $0x8] sm:$0xff]
        %v297 = vpack.c.bf16 %v295, %v295
        %v298 = vpack.c.bf16 %v296, %v296
        %v299 = vld [vmem:[#allocation6] sm:$0xf]
        %v300 = vld [vmem:[#allocation6 + $0x4] sm:$0xf]
        %v301 = vld [vmem:[#allocation6 + $0x8] sm:$0xf]
        %v302 = vld [vmem:[#allocation6 + $0xc] sm:$0xf]
        %v303 = vld [vmem:[#allocation6 + $0x10] sm:$0xf]
        %v304 = vld [vmem:[#allocation6 + $0x14] sm:$0xf]
        %v305 = vld [vmem:[#allocation6 + $0x18] sm:$0xf]
        %v306 = vld [vmem:[#allocation6 + $0x1c] sm:$0xf]
        %v307 = vld [vmem:[#allocation6 + $0x20] sm:$0xf]
        %v308 = vld [vmem:[#allocation6 + $0x24] sm:$0xf]
        %v309 = vld [vmem:[#allocation6 + $0x28] sm:$0xf]
        %v310 = vld [vmem:[#allocation6 + $0x2c] sm:$0xf]
        %v311 = vld [vmem:[#allocation6 + $0x30] sm:$0xf]
        %v312 = vld [vmem:[#allocation6 + $0x34] sm:$0xf]
        %v313 = vld [vmem:[#allocation6 + $0x38] sm:$0xf]
        %v314 = vld [vmem:[#allocation6 + $0x3c] sm:$0xf]
        %v315 = vld [vmem:[#allocation6 + $0x40] sm:$0xf]
        %v316 = vld [vmem:[#allocation6 + $0x44] sm:$0xf]
        %v317 = vld [vmem:[#allocation6 + $0x48] sm:$0xf]
        %v318 = vld [vmem:[#allocation6 + $0x4c] sm:$0xf]
        %v319 = vld [vmem:[#allocation6 + $0x50] sm:$0xf]
        %v320 = vld [vmem:[#allocation6 + $0x54] sm:$0xf]
        %v321 = vld [vmem:[#allocation6 + $0x58] sm:$0xf]
        %v322 = vld [vmem:[#allocation6 + $0x5c] sm:$0xf]
        %v323 = vld [vmem:[#allocation6 + $0x60] sm:$0xf]
        %v324 = vld [vmem:[#allocation6 + $0x64] sm:$0xf]
        %v325 = vld [vmem:[#allocation6 + $0x68] sm:$0xf]
        %v326 = vld [vmem:[#allocation6 + $0x6c] sm:$0xf]
        %v327 = vld [vmem:[#allocation6 + $0x70] sm:$0xf]
        %v328 = vld [vmem:[#allocation6 + $0x74] sm:$0xf]
        %v329 = vld [vmem:[#allocation6 + $0x78] sm:$0xf]
        %v330 = vld [vmem:[#allocation6 + $0x7c] sm:$0xf]
        %v363 = vunpack.c.l.b16 %v299
        %v364 = vunpack.c.l.b16 %v300
        %v365 = vunpack.c.l.b16 %v301
        %v366 = vunpack.c.l.b16 %v302
        %v367 = vunpack.c.l.b16 %v303
        %v368 = vunpack.c.l.b16 %v304
        %v369 = vunpack.c.l.b16 %v305
        %v370 = vunpack.c.l.b16 %v306
        %v371 = vunpack.c.l.b16 %v307
        %v372 = vunpack.c.l.b16 %v308
        %v373 = vunpack.c.l.b16 %v309
        %v374 = vunpack.c.l.b16 %v310
        %v375 = vunpack.c.l.b16 %v311
        %v376 = vunpack.c.l.b16 %v312
        %v377 = vunpack.c.l.b16 %v313
        %v378 = vunpack.c.l.b16 %v314
        %v379 = vunpack.c.l.b16 %v315
        %v380 = vunpack.c.l.b16 %v316
        %v381 = vunpack.c.l.b16 %v317
        %v382 = vunpack.c.l.b16 %v318
        %v383 = vunpack.c.l.b16 %v319
        %v384 = vunpack.c.l.b16 %v320
        %v385 = vunpack.c.l.b16 %v321
        %v386 = vunpack.c.l.b16 %v322
        %v387 = vunpack.c.l.b16 %v323
        %v388 = vunpack.c.l.b16 %v324
        %v389 = vunpack.c.l.b16 %v325
        %v390 = vunpack.c.l.b16 %v326
        %v391 = vunpack.c.l.b16 %v327
        %v392 = vunpack.c.l.b16 %v328
        %v393 = vunpack.c.l.b16 %v329
        %v394 = vunpack.c.l.b16 %v330
        %v395 = vpack.c.b16 %v364, %v363
        %v396 = vpack.c.b16 %v366, %v365
        %v397 = vpack.c.b16 %v368, %v367
        %v398 = vpack.c.b16 %v370, %v369
        %v399 = vpack.c.b16 %v372, %v371
        %v400 = vpack.c.b16 %v374, %v373
        %v401 = vpack.c.b16 %v376, %v375
        %v402 = vpack.c.b16 %v378, %v377
        %v403 = vpack.c.b16 %v380, %v379
        %v404 = vpack.c.b16 %v382, %v381
        %v405 = vpack.c.b16 %v384, %v383
        %v406 = vpack.c.b16 %v386, %v385
        %v407 = vpack.c.b16 %v388, %v387
        %v408 = vpack.c.b16 %v390, %v389
        %v409 = vpack.c.b16 %v392, %v391
        %v410 = vpack.c.b16 %v394, %v393
        %427 = vmatprep.subr.bf16.mxu0 0
        %428 = vmatpush1.bf16.msra.mxu0 %v402
        %429 = vmatprep.subr.bf16.mxu0 0
        %430 = vmatpush1.bf16.msra.mxu0 %v401
        %431 = vmatprep.subr.bf16.mxu0 0
        %432 = vmatpush1.bf16.msra.mxu0 %v400
        %433 = vmatprep.subr.bf16.mxu0 0
        %434 = vmatpush1.bf16.msra.mxu0 %v399
        %435 = vmatprep.subr.bf16.mxu0 0
        %436 = vmatpush1.bf16.msra.mxu0 %v398
        %437 = vmatprep.subr.bf16.mxu0 0
        %438 = vmatpush1.bf16.msra.mxu0 %v397
        %439 = vmatprep.subr.bf16.mxu0 0
        %440 = vmatpush1.bf16.msra.mxu0 %v396
        %441 = vmatprep.subr.bf16.mxu0 0
        %442 = vmatpush1.bf16.msra.mxu0 %v395
        %443 = vmatprep.subr.bf16.mxu0 0
        %444 = vmatpush2.bf16.msra.mxu0 %v410
        %445 = vmatprep.subr.bf16.mxu0 0
        %446 = vmatpush2.bf16.msra.mxu0 %v409
        %447 = vmatprep.subr.bf16.mxu0 0
        %448 = vmatpush2.bf16.msra.mxu0 %v408
        %449 = vmatprep.subr.bf16.mxu0 0
        %450 = vmatpush2.bf16.msra.mxu0 %v407
        %451 = vmatprep.subr.bf16.mxu0 0
        %452 = vmatpush2.bf16.msra.mxu0 %v406
        %453 = vmatprep.subr.bf16.mxu0 0
        %454 = vmatpush2.bf16.msra.mxu0 %v405
        %455 = vmatprep.subr.bf16.mxu0 0
        %456 = vmatpush2.bf16.msra.mxu0 %v404
        %457 = vmatprep.subr.bf16.mxu0 0
        %458 = vmatpush2.bf16.msra.mxu0 %v403
        %459 = vmatprep.mubr.bf16.mxu0 %v298
        %460 = vmatmul.mubr.bf16.gmra.mxu0 %v297
        %v461 = vpop.f32.mrf.mxu0
        %v462 = vadd.f32 0.0, %v461
        %v463 = vpop.f32.mrf.mxu0
        %v464 = vpop.f32.mrf.mxu0
        %v465 = vpop.f32.mrf.mxu0
        %466 = vdwg.mxu0
        %v467 = vld [vmem:[#allocation2] sm:$0xff]
        %v468 = vld [vmem:[%s288] sm:$0xf]
        %v469 = vpack.c.bf16 %v462, %v462
        %vm470 = vcmask 64512
        %v472 = vsel %vm470, %v468, 0
        %vm474 = vcmask 1043456
        %v476 = vsel %vm474, %v469, 0
        %478 = vmatprep.subr.bf16.mxu0 0
        %479 = vmatpush1.bf16.msra.mxu0 0
        %480 = vmatprep.subr.bf16.mxu0 0
        %481 = vmatpush1.bf16.msra.mxu0 0
        %482 = vmatprep.subr.bf16.mxu0 0
        %483 = vmatpush1.bf16.msra.mxu0 0
        %484 = vmatprep.subr.bf16.mxu0 0
        %485 = vmatpush1.bf16.msra.mxu0 0
        %486 = vmatprep.subr.bf16.mxu0 0
        %487 = vmatpush1.bf16.msra.mxu0 0
        %488 = vmatprep.subr.bf16.mxu0 0
        %489 = vmatpush1.bf16.msra.mxu0 0
        %490 = vmatprep.subr.bf16.mxu0 0
        %491 = vmatpush1.bf16.msra.mxu0 0
        %492 = vmatprep.subr.bf16.mxu0 0
        %493 = vmatpush1.bf16.msra.mxu0 %v476
        %494 = vmatprep.subr.bf16.mxu0 0
        %495 = vmatpush2.bf16.msra.mxu0 0
        %496 = vmatprep.subr.bf16.mxu0 0
        %497 = vmatpush2.bf16.msra.mxu0 0
        %498 = vmatprep.subr.bf16.mxu0 0
        %499 = vmatpush2.bf16.msra.mxu0 0
        %500 = vmatprep.subr.bf16.mxu0 0
        %501 = vmatpush2.bf16.msra.mxu0 0
        %502 = vmatprep.subr.bf16.mxu0 0
        %503 = vmatpush2.bf16.msra.mxu0 0
        %504 = vmatprep.subr.bf16.mxu0 0
        %505 = vmatpush2.bf16.msra.mxu0 0
        %506 = vmatprep.subr.bf16.mxu0 0
        %507 = vmatpush2.bf16.msra.mxu0 0
        %508 = vmatprep.subr.bf16.mxu0 0
        %509 = vmatpush2.bf16.msra.mxu0 0
        %510 = vmatprep.mubr.bf16.mxu0 0
        %511 = vmatmul.mubr.bf16.gmra.mxu0 %v472
        %v512 = vpop.f32.mrf.mxu0
        %v513 = vadd.f32 0.0, %v512
        %v514 = vpop.f32.mrf.mxu0
        %v515 = vpop.f32.mrf.mxu0
        %v516 = vpop.f32.mrf.mxu0
        %517 = vdwg.mxu0
        %v518 = vadd.f32 %v467, %v513
        %519 = vst [vmem:[#allocation2] sm:$0xff] %v518
        // Predicated region
        $region53: #{tpu_custom_call.1} parent=39 // pred_check
          %p520 = pneg %p290
        $region54: #{tpu_custom_call.1} parent=39 // pred_check_branch
          %522 = sbr.rel (%p520) target = $region56
        $region55: #{tpu_custom_call.1} parent=39 // pred_region
          %v523 = vld [vmem:[#allocation2] sm:$0xff]
          %v524 = vld [vmem:[%s3] sm:$0xff]
          %526 = vset.pattern.permute.xlu0 0
          %527 = vperm.xlu0 %526, %v524
          %v528 = vpop.permute.xlu0 %527
          %v530 = vadd.f32 %v523, %v528
          %v531 = vmax.f32 %v530, 0.0
          %v532 = vld [vmem:[%s4] sm:$0xff]
          %v533 = vmul.f32 %v531, %v532
          %v534 = vpack.c.bf16 %v533, %v533
          %535 = vst [vmem:[%s284] sm:$0xf] %v534
        $region56: #{tpu_custom_call.1} parent=39 // pred_fallthru
          _
        %s536 = sand.u32 %s160, 1
        %s537 = scalar_lea.sflag [#allocation5], %s536
        %s538 = sand.u32 %s160, 1
        %s539 = smul.addr %s538, 4
        %s540 = scalar_lea.vmem [#allocation8], %s539
        // Predicated region
        $region57: #{tpu_custom_call.1} parent=39 // pred_check
          %p541 = pneg %p170
        $region58: #{tpu_custom_call.1} parent=39 // pred_check_branch
          %543 = sbr.rel (%p541) target = $region60
        $region59: #{tpu_custom_call.1} parent=39 // pred_region
          %s545 = ssub.s32 64, 64
          %546 = vsyncadd %s537, %s545
          %s547 = smul.addr %s27, 64
          %s548 = scalar_lea.hbm %s5, %s547
          %s550 = sshll.u32 %s540, 4
          %s551 = int_to_ptr.vmem [resolvable:$true] %s550
          %553 = dma.vmem_to_hbm [thread:$0]  %s551, 64, %s548, %s537
        $region60: #{tpu_custom_call.1} parent=39 // pred_fallthru
          _
      $region40: #{tpu_custom_call.1} parent=5 // pred_fallthru
        _
      %p554 = scmp.le.s32.totalorder 2, %s18
      // Predicated region
      $region61: #{tpu_custom_call.1} parent=5 // pred_check
        %p555 = pneg %p554
      $region62: #{tpu_custom_call.1} parent=5 // pred_check_branch
        %557 = sbr.rel (%p555) target = $region64
      $region63: #{tpu_custom_call.1} parent=5 // pred_region
        %s558 = ssub.s32 %s18, 2
        // Predicated region
        $region65: #{tpu_custom_call.1} parent=63 // pred_check
          %p559 = pneg %p176
        $region66: #{tpu_custom_call.1} parent=63 // pred_check_branch
          %561 = sbr.rel (%p559) target = $region68
        $region67: #{tpu_custom_call.1} parent=63 // pred_region
          %s562 = sand.u32 %s161, 1
          %s563 = scalar_lea.sflag [#allocation5], %s562
          %s564 = sand.u32 %s161, 1
          %s565 = smul.addr %s564, 4
          %s566 = scalar_lea.vmem [#allocation8], %s565
          %567 = dma.done %s563, 64
        $region68: #{tpu_custom_call.1} parent=63 // pred_fallthru
          _
      $region64: #{tpu_custom_call.1} parent=5 // pred_fallthru
        _
    $region6: #{tpu_custom_call.1} parent=1 // loop_footer
      %s22 = sadd.s32 1, %s18
    $region7: #{tpu_custom_call.1} parent=1 // loop_footer_branch
      %17 = sbr.rel target = $region3
    $region8: #{tpu_custom_call.1} parent=1 // loop_exit
      _
    %568 = vsyncpa [#allocation4], 1
    %s569 = scalar_lea.sflag [#allocation4], 1
    %570 = vsyncpa %s569, 1
    %571 = vsyncpa [#allocation7], 1
    %572 = vsyncpa [#allocation5], 1
    %s573 = scalar_lea.sflag [#allocation5], 1
    %574 = vsyncpa %s573, 1

</llo_original>
